<compile_context>
chip_gen: v7x
topology: tpu7x:2x2x1
jax: 0.10.0
libtpu: 0.0.40
codegen_flags: <defaults>
</compile_context>

<pallas_src>
import functools

import jax
import jax.numpy as jnp
from jax.experimental import pallas as pl
from jax.experimental.pallas import tpu as pltpu

_EPS = 1e-5


# ---------------------------------------------------------------------------
# In-kernel helpers
# ---------------------------------------------------------------------------

def _zero_pad_hw1(x):
    """Zero-pad a (H, W, C) tile by 1 pixel on each spatial side, in VMEM."""
    H, W, C = x.shape
    zrow = jnp.zeros((1, W, C), x.dtype)
    xp = jnp.concatenate([zrow, x, zrow], axis=0)
    zcol = jnp.zeros((H + 2, 1, C), x.dtype)
    return jnp.concatenate([zcol, xp, zcol], axis=1)


def _im2col_3x3(xpad, H, W, C):
    """(H+2, W+2, C) -> (H*W, 9*C) patch matrix; column order (dy, dx, c)."""
    cols = []
    for dy in range(3):
        for dx in range(3):
            cols.append(xpad[dy:dy + H, dx:dx + W, :].reshape(H * W, C))
    return jnp.concatenate(cols, axis=1)


def _col_stats(y):
    """Per-channel (sum, sum-of-squares) of an (M, C) f32 tile -> (2, C)."""
    return jnp.concatenate(
        [jnp.sum(y, axis=0, keepdims=True),
         jnp.sum(y * y, axis=0, keepdims=True)], axis=0)


# ---------------------------------------------------------------------------
# Kernels (one batch sample per grid step)
# ---------------------------------------------------------------------------

def _conv1_stats_kernel(x_ref, w_ref, b_ref, y_ref, s_ref, *, H, W):
    """conv3x3 (im2col, single matmul) + BN partial statistics epilogue."""
    Cin = x_ref.shape[-1]
    x = x_ref[0]                                              # (H, W, Cin), model dtype
    pmat = _im2col_3x3(_zero_pad_hw1(x), H, W, Cin)           # (H*W, 9*Cin)
    y = jnp.dot(pmat, w_ref[...], preferred_element_type=jnp.float32)
    y = y + b_ref[...].astype(jnp.float32)                    # (H*W, Cout) f32
    y_ref[0] = y.astype(y_ref.dtype)
    s_ref[0] = _col_stats(y)


def _bn_relu_conv2_stats_kernel(y1_ref, sc_ref, sh_ref, w_ref, b_ref,
                                y2_ref, s_ref, *, H, W):
    """BN1-normalize + ReLU + conv3x3 (im2col matmul) + BN2 partial stats."""
    Cmid = y1_ref.shape[-1]
    h = jnp.maximum(y1_ref[0] * sc_ref[...] + sh_ref[...], 0.0)          # f32
    pmat = _im2col_3x3(_zero_pad_hw1(h.reshape(H, W, Cmid)), H, W, Cmid)
    y = jnp.dot(pmat.astype(w_ref.dtype), w_ref[...],
                preferred_element_type=jnp.float32)
    y = y + b_ref[...].astype(jnp.float32)                               # (H*W, Cout)
    y2_ref[0] = y.astype(y2_ref.dtype)
    s_ref[0] = _col_stats(y)


def _bn_relu_residual_kernel(y2_ref, sc_ref, sh_ref, x_ref, o_ref):
    """BN2-normalize + ReLU + identity residual add + final ReLU."""
    h2 = jnp.maximum(y2_ref[0] * sc_ref[...] + sh_ref[...], 0.0)
    out = jnp.maximum(h2 + x_ref[0].astype(jnp.float32), 0.0)
    o_ref[0] = out.astype(o_ref.dtype)


# ---------------------------------------------------------------------------
# Wrapper
# ---------------------------------------------------------------------------

def _bn_scale_shift(part_stats, gamma, beta, count):
    """Fold per-sample (sum, sumsq) partials into per-channel BN scale/shift.

    Uses var = E[x^2] - E[x]^2 (biased). Cancellation risk is negligible at these
    activation magnitudes with eps=1e-5 and is tolerance-tested against a two-pass
    reference below.
    """
    s = jnp.sum(part_stats.astype(jnp.float32), axis=0)        # (2, C)
    mean = s[0] / count
    var = jnp.maximum(s[1] / count - mean * mean, 0.0)
    scale = gamma.astype(jnp.float32) * jax.lax.rsqrt(var + _EPS)
    shift = beta.astype(jnp.float32) - mean * scale
    return scale.reshape(1, -1), shift.reshape(1, -1)


def _compiler_params(block_bytes_estimate):
    # double-buffered tiles + headroom; clamped so the demo shapes keep defaults
    # and large shapes raise the scoped limit without exceeding physical VMEM.
    vmem = int(min(max(2 * block_bytes_estimate + (8 << 20), 32 << 20), 100 << 20))
    return pltpu.CompilerParams(dimension_semantics=("parallel",),
                                vmem_limit_bytes=vmem)


def residual_block(x_nchw, params):
    """Forward pass of ResidualBlock(in_channels=C, out_channels=C, stride=1)."""
    w1, b1, g1, be1, w2, b2, g2, be2 = params
    N, Cin, H, W = x_nchw.shape
    Cout = w1.shape[0]
    assert Cin == Cout, "identity residual (downsample=None) requires Cin == Cout"
    dt = x_nchw.dtype
    f32 = jnp.float32
    M = H * W
    count = N * M

    # NCHW -> NHWC once at the boundary (the rest is channel-minor layout).
    x_nhwc = jnp.transpose(x_nchw, (0, 2, 3, 1))               # (N, H, W, Cin)
    x_flat = x_nhwc.reshape(N, M, Cin)                         # contiguous reshape

    # OIHW -> (9*Cin, Cout) im2col weight matrices, column order (dy, dx, ci).
    w1m = jnp.transpose(w1, (2, 3, 1, 0)).reshape(9 * Cin, Cout).astype(dt)
    w2m = jnp.transpose(w2, (2, 3, 1, 0)).reshape(9 * Cout, Cout).astype(dt)
    b1r = b1.reshape(1, Cout).astype(f32)
    b2r = b2.reshape(1, Cout).astype(f32)

    itm = jnp.dtype(dt).itemsize
    est = (M * Cin * itm                      # input tile
           + 9 * M * max(Cin, Cout) * 4       # im2col patches (worst case f32)
           + 2 * M * Cout * 4                 # activation in/out tiles
           + 9 * max(Cin, Cout) * Cout * itm) # weight matrix
    cparams = _compiler_params(est)

    vec_spec = pl.BlockSpec((1, Cout), lambda n: (0, 0))
    act_spec = pl.BlockSpec((1, M, Cout), lambda n: (n, 0, 0))
    stat_spec = pl.BlockSpec((1, 2, Cout), lambda n: (n, 0, 0))

    # --- stage 1: conv1 + per-sample BN1 partial statistics -------------------
    y1, s1 = pl.pallas_call(
        functools.partial(_conv1_stats_kernel, H=H, W=W),
        grid=(N,),
        in_specs=[
            pl.BlockSpec((1, H, W, Cin), lambda n: (n, 0, 0, 0)),
            pl.BlockSpec((9 * Cin, Cout), lambda n: (0, 0)),
            vec_spec,
        ],
        out_specs=[act_spec, stat_spec],
        out_shape=[
            jax.ShapeDtypeStruct((N, M, Cout), f32),
            jax.ShapeDtypeStruct((N, 2, Cout), f32),
        ],
        compiler_params=cparams,
    )(x_nhwc, w1m, b1r)

    sc1, sh1 = _bn_scale_shift(s1, g1, be1, count)

    # --- stage 2: BN1 + ReLU -> conv2 + per-sample BN2 partial statistics -----
    y2, s2 = pl.pallas_call(
        functools.partial(_bn_relu_conv2_stats_kernel, H=H, W=W),
        grid=(N,),
        in_specs=[
            act_spec,
            vec_spec, vec_spec,
            pl.BlockSpec((9 * Cout, Cout), lambda n: (0, 0)),
            vec_spec,
        ],
        out_specs=[act_spec, stat_spec],
        out_shape=[
            jax.ShapeDtypeStruct((N, M, Cout), f32),
            jax.ShapeDtypeStruct((N, 2, Cout), f32),
        ],
        compiler_params=cparams,
    )(y1, sc1, sh1, w2m, b2r)

    sc2, sh2 = _bn_scale_shift(s2, g2, be2, count)

    # --- stage 3: BN2 + ReLU + identity residual + final ReLU -----------------
    out_flat = pl.pallas_call(
        _bn_relu_residual_kernel,
        grid=(N,),
        in_specs=[
            act_spec,
            vec_spec, vec_spec,
            pl.BlockSpec((1, M, Cin), lambda n: (n, 0, 0)),
        ],
        out_specs=act_spec,
        out_shape=jax.ShapeDtypeStruct((N, M, Cout), dt),
        compiler_params=cparams,
    )(y2, sc2, sh2, x_flat)

    # NOTE: next-level optimization for very large spatial dims would add an H-row
    # grid axis with halo blocks; per-sample tiling is sufficient at ResNet sizes.
    return jnp.transpose(out_flat.reshape(N, H, W, Cout), (0, 3, 1, 2))


# ---------------------------------------------------------------------------
# Plain-JAX reference (for verification)
# ---------------------------------------------------------------------------

def _ref_forward(x_nchw, params):
    w1, b1, g1, be1, w2, b2, g2, be2 = params

    def conv(x, w, b):
        y = jax.lax.conv_general_dilated(
            x, w, window_strides=(1, 1), padding=((1, 1), (1, 1)),
            dimension_numbers=('NCHW', 'OIHW', 'NCHW'))
        return y + b.reshape(1, -1, 1, 1)

    def bn_relu(y, g, be):
        mean = jnp.mean(y, axis=(0, 2, 3), keepdims=True)
        var = jnp.mean((y - mean) ** 2, axis=(0, 2, 3), keepdims=True)
        yh = (y - mean) / jnp.sqrt(var + _EPS)
        yh = yh * g.reshape(1, -1, 1, 1) + be.reshape(1, -1, 1, 1)
        return jnp.maximum(yh, 0.0)

    h = bn_relu(conv(x_nchw, w1, b1), g1, be1)
    h2 = bn_relu(conv(h, w2, b2), g2, be2)
    return jnp.maximum(h2 + x_nchw, 0.0)


if __name__ == "__main__":
    key = jax.random.PRNGKey(0)
    N, Cin, Cout, H, W = 2, 4, 4, 16, 16   # in_channels == out_channels (no downsample)
    ks = jax.random.split(key, 5)

    x = jax.random.normal(ks[0], (N, Cin, H, W), jnp.float32)

    # PyTorch-style init: conv U(-k, k), k = 1/sqrt(fan_in*9); BN weight=1, bias=0.
    k1 = 1.0 / (Cin * 9) ** 0.5
    w1 = jax.random.uniform(ks[1], (Cout, Cin, 3, 3), jnp.float32, -k1, k1)
    b1 = jax.random.uniform(ks[2], (Cout,), jnp.float32, -k1, k1)
    k2 = 1.0 / (Cout * 9) ** 0.5
    w2 = jax.random.uniform(ks[3], (Cout, Cout, 3, 3), jnp.float32, -k2, k2)
    b2 = jax.random.uniform(ks[4], (Cout,), jnp.float32, -k2, k2)
    g1 = jnp.ones((Cout,), jnp.float32)
    be1 = jnp.zeros((Cout,), jnp.float32)
    g2 = jnp.ones((Cout,), jnp.float32)
    be2 = jnp.zeros((Cout,), jnp.float32)
    params = (w1, b1, g1, be1, w2, b2, g2, be2)

    out = residual_block(x, params)
    jax.block_until_ready(out)

    ref = _ref_forward(x, params)
    err = float(jnp.max(jnp.abs(out - ref)))
    assert jnp.allclose(out, ref, atol=2e-4, rtol=2e-4), f"max abs err {err}"
    print("KERNEL_OK")
</pallas_src>

<mosaic_0001>
module attributes {stable_mosaic.version = 11 : i64} {
  func.func @_conv1_stats_kernel(%arg0: i32, %arg1: memref<1x16x16x4xf32, #tpu.memory_space<vmem>>, %arg2: memref<36x4xf32, #tpu.memory_space<vmem>>, %arg3: memref<1x4xf32, #tpu.memory_space<vmem>>, %arg4: memref<1x256x4xf32, #tpu.memory_space<vmem>>, %arg5: memref<1x2x4xf32, #tpu.memory_space<vmem>>) attributes {dimension_semantics = [#tpu.dimension_semantics<parallel>], iteration_bounds = array<i64: 2>, scalar_prefetch = 0 : i64, scratch_operands = 0 : i64, tpu.core_type = #tpu.core_type<tc>, window_params = [{transform_indices = @transform_0, window_bounds = array<i64: 1, 16, 16, 4>}, {pipeline_mode = #tpu.pipeline_mode<synchronous>, transform_indices = @transform_1, window_bounds = array<i64: 36, 4>}, {pipeline_mode = #tpu.pipeline_mode<synchronous>, transform_indices = @transform_2, window_bounds = array<i64: 1, 4>}, {transform_indices = @transform_3, window_bounds = array<i64: 1, 256, 4>}, {transform_indices = @transform_4, window_bounds = array<i64: 1, 2, 4>}]} {
    %c0 = arith.constant 0 : index
    %c0_0 = arith.constant 0 : index
    %c0_1 = arith.constant 0 : index
    %c0_2 = arith.constant 0 : index
    %0 = vector.load %arg1[%c0, %c0_0, %c0_1, %c0_2] : memref<1x16x16x4xf32, #tpu.memory_space<vmem>>, vector<1x16x16x4xf32>
    %1 = vector.shape_cast %0 : vector<1x16x16x4xf32> to vector<16x16x4xf32>
    %cst = arith.constant 0.000000e+00 : f32
    %2 = vector.broadcast %cst : f32 to vector<1x16x4xf32>
    %3 = tpu.concatenate %2, %1, %2 in 0 : vector<1x16x4xf32>, vector<16x16x4xf32>, vector<1x16x4xf32> -> vector<18x16x4xf32>
    %cst_3 = arith.constant 0.000000e+00 : f32
    %4 = vector.broadcast %cst_3 : f32 to vector<18x1x4xf32>
    %5 = tpu.concatenate %4, %3, %4 in 1 : vector<18x1x4xf32>, vector<18x16x4xf32>, vector<18x1x4xf32> -> vector<18x18x4xf32>
    %6 = vector.extract_strided_slice %5 {offsets = [0, 0, 0], sizes = [16, 16, 4], strides = [1, 1, 1]} : vector<18x18x4xf32> to vector<16x16x4xf32>
    %7 = vector.shape_cast %6 : vector<16x16x4xf32> to vector<256x4xf32>
    %8 = vector.extract_strided_slice %5 {offsets = [0, 1, 0], sizes = [16, 16, 4], strides = [1, 1, 1]} : vector<18x18x4xf32> to vector<16x16x4xf32>
    %9 = vector.shape_cast %8 : vector<16x16x4xf32> to vector<256x4xf32>
    %10 = vector.extract_strided_slice %5 {offsets = [0, 2, 0], sizes = [16, 16, 4], strides = [1, 1, 1]} : vector<18x18x4xf32> to vector<16x16x4xf32>
    %11 = vector.shape_cast %10 : vector<16x16x4xf32> to vector<256x4xf32>
    %12 = vector.extract_strided_slice %5 {offsets = [1, 0, 0], sizes = [16, 16, 4], strides = [1, 1, 1]} : vector<18x18x4xf32> to vector<16x16x4xf32>
    %13 = vector.shape_cast %12 : vector<16x16x4xf32> to vector<256x4xf32>
    %14 = vector.extract_strided_slice %5 {offsets = [1, 1, 0], sizes = [16, 16, 4], strides = [1, 1, 1]} : vector<18x18x4xf32> to vector<16x16x4xf32>
    %15 = vector.shape_cast %14 : vector<16x16x4xf32> to vector<256x4xf32>
    %16 = vector.extract_strided_slice %5 {offsets = [1, 2, 0], sizes = [16, 16, 4], strides = [1, 1, 1]} : vector<18x18x4xf32> to vector<16x16x4xf32>
    %17 = vector.shape_cast %16 : vector<16x16x4xf32> to vector<256x4xf32>
    %18 = vector.extract_strided_slice %5 {offsets = [2, 0, 0], sizes = [16, 16, 4], strides = [1, 1, 1]} : vector<18x18x4xf32> to vector<16x16x4xf32>
    %19 = vector.shape_cast %18 : vector<16x16x4xf32> to vector<256x4xf32>
    %20 = vector.extract_strided_slice %5 {offsets = [2, 1, 0], sizes = [16, 16, 4], strides = [1, 1, 1]} : vector<18x18x4xf32> to vector<16x16x4xf32>
    %21 = vector.shape_cast %20 : vector<16x16x4xf32> to vector<256x4xf32>
    %22 = vector.extract_strided_slice %5 {offsets = [2, 2, 0], sizes = [16, 16, 4], strides = [1, 1, 1]} : vector<18x18x4xf32> to vector<16x16x4xf32>
    %23 = vector.shape_cast %22 : vector<16x16x4xf32> to vector<256x4xf32>
    %24 = tpu.concatenate %7, %9, %11, %13, %15, %17, %19, %21, %23 in 1 : vector<256x4xf32>, vector<256x4xf32>, vector<256x4xf32>, vector<256x4xf32>, vector<256x4xf32>, vector<256x4xf32>, vector<256x4xf32>, vector<256x4xf32>, vector<256x4xf32> -> vector<256x36xf32>
    %c0_4 = arith.constant 0 : index
    %c0_5 = arith.constant 0 : index
    %25 = vector.load %arg2[%c0_4, %c0_5] : memref<36x4xf32, #tpu.memory_space<vmem>>, vector<36x4xf32>
    %cst_6 = arith.constant dense<0.000000e+00> : vector<256x4xf32>
    %26 = tpu.matmul %24, %25, %cst_6 {dimension_numbers = #tpu.dot_dimension_numbers<[1], [0], [0], [1], [0, 0, 1, 1], [], []>} : vector<256x36xf32>, vector<36x4xf32>, vector<256x4xf32> -> vector<256x4xf32>
    %c0_7 = arith.constant 0 : index
    %c0_8 = arith.constant 0 : index
    %27 = vector.load %arg3[%c0_7, %c0_8] : memref<1x4xf32, #tpu.memory_space<vmem>>, vector<1x4xf32>
    %28 = vector.broadcast %27 : vector<1x4xf32> to vector<256x4xf32>
    %29 = arith.addf %26, %28 : vector<256x4xf32>
    %c0_9 = arith.constant 0 : index
    %c0_10 = arith.constant 0 : index
    %c0_11 = arith.constant 0 : index
    %30 = vector.load %arg4[%c0_9, %c0_10, %c0_11] : memref<1x256x4xf32, #tpu.memory_space<vmem>>, vector<1x256x4xf32>
    %31 = vector.shape_cast %30 : vector<1x256x4xf32> to vector<256x4xf32>
    %32 = vector.shape_cast %29 : vector<256x4xf32> to vector<1x256x4xf32>
    tpu.vector_store %arg4[%c0_9, %c0_10, %c0_11], %32 {strides = array<i32>} : memref<1x256x4xf32, #tpu.memory_space<vmem>>, vector<1x256x4xf32>,
    %cst_12 = arith.constant dense<0.000000e+00> : vector<4xf32>
    %33 = vector.multi_reduction <add>, %29, %cst_12 [0] : vector<256x4xf32> to vector<4xf32>
    %34 = vector.shape_cast %33 : vector<4xf32> to vector<1x4xf32>
    %35 = arith.mulf %29, %29 : vector<256x4xf32>
    %cst_13 = arith.constant dense<0.000000e+00> : vector<4xf32>
    %36 = vector.multi_reduction <add>, %35, %cst_13 [0] : vector<256x4xf32> to vector<4xf32>
    %37 = vector.shape_cast %36 : vector<4xf32> to vector<1x4xf32>
    %38 = tpu.concatenate %34, %37 in 0 : vector<1x4xf32>, vector<1x4xf32> -> vector<2x4xf32>
    %c0_14 = arith.constant 0 : index
    %c0_15 = arith.constant 0 : index
    %c0_16 = arith.constant 0 : index
    %39 = vector.load %arg5[%c0_14, %c0_15, %c0_16] : memref<1x2x4xf32, #tpu.memory_space<vmem>>, vector<1x2x4xf32>
    %40 = vector.shape_cast %39 : vector<1x2x4xf32> to vector<2x4xf32>
    %41 = vector.shape_cast %38 : vector<2x4xf32> to vector<1x2x4xf32>
    tpu.vector_store %arg5[%c0_14, %c0_15, %c0_16], %41 {strides = array<i32>} : memref<1x2x4xf32, #tpu.memory_space<vmem>>, vector<1x2x4xf32>,
    return
  }
  func.func @transform_0(%arg0: i32) -> (i32, i32, i32, i32) {
    %c0_i32 = arith.constant 0 : i32
    %c0_i32_0 = arith.constant 0 : i32
    %c0_i32_1 = arith.constant 0 : i32
    %c0_i32_2 = arith.constant 0 : i32
    return %arg0, %c0_i32, %c0_i32_0, %c0_i32_1 : i32, i32, i32, i32
  }
  func.func @transform_1(%arg0: i32) -> (i32, i32) {
    %c0_i32 = arith.constant 0 : i32
    %c0_i32_0 = arith.constant 0 : i32
    %c0_i32_1 = arith.constant 0 : i32
    return %c0_i32, %c0_i32_0 : i32, i32
  }
  func.func @transform_2(%arg0: i32) -> (i32, i32) {
    %c0_i32 = arith.constant 0 : i32
    %c0_i32_0 = arith.constant 0 : i32
    %c0_i32_1 = arith.constant 0 : i32
    return %c0_i32, %c0_i32_0 : i32, i32
  }
  func.func @transform_3(%arg0: i32) -> (i32, i32, i32) {
    %c0_i32 = arith.constant 0 : i32
    %c0_i32_0 = arith.constant 0 : i32
    %c0_i32_1 = arith.constant 0 : i32
    return %arg0, %c0_i32, %c0_i32_0 : i32, i32, i32
  }
  func.func @transform_4(%arg0: i32) -> (i32, i32, i32) {
    %c0_i32 = arith.constant 0 : i32
    %c0_i32_0 = arith.constant 0 : i32
    %c0_i32_1 = arith.constant 0 : i32
    return %arg0, %c0_i32, %c0_i32_0 : i32, i32, i32
  }
}

</mosaic_0001>

<llo_original>
// kernel: tpu_custom_call.1
$region0: #{tpu_custom_call.1}
  #allocation0 [shape = 'u32[]', space=smem, size = 0x4, offset = 0x4, fixed_abs, tag = 'smem constant byte address 0x4 - core index']
  #allocation1 [shape = 'u32[144,128]{1,0:T(1,128)}', space=vmem, size = 0x12000, scoped, tag = 'internal scratch']
  %s0 = inlined_call_operand.vmem [shape: f32[2,16,16,4], index: 0, kind: input, shape index: {}]
  %s1 = inlined_call_operand.vmem [shape: f32[36,4], index: 1, kind: input, shape index: {}]
  %s2 = inlined_call_operand.vmem [shape: f32[1,4], index: 2, kind: input, shape index: {}]
  %s3 = inlined_call_operand.vmem [shape: f32[2,256,4], index: 3, kind: output, shape index: {0}]
  %s4 = inlined_call_operand.hbm [shape: f32[2,2,4], index: 4, kind: output, shape index: {1}]
  %5 = xla_tuple %s3, %s4
  %s6 = sld [smem:[#allocation0]]
  $region53: #{tpu_custom_call.1} parent=0
    _
  %s8 = ssub.s32 1, %s6
  %s9 = scalar_select 0, %s8, %s6
  $region1: #{tpu_custom_call.1} parent=0
    #allocation2 [shape = 'u8[2048]{0}', space=vmem, size = 0x800, scoped, tag = 'output window, operand 1']
    #allocation3 [shape = 's32[2]{0}', space=sflag, size = 0x8, scoped, tag = 'scoped memory for tpu_custom_call.1']
    %10 = vsyncpa [#allocation3], 0
    %s11 = scalar_lea.sflag [#allocation3], 1
    %12 = vsyncpa %s11, 0
    loop: start=0, step=1, limit=4
    $region2: #{tpu_custom_call.1} parent=1 // loop_pre_header
      _
    $region3: #{tpu_custom_call.1} parent=1 // loop_header
      %s14 = sphi 0, %s18
      %p15 = scmp.ge.s32.totalorder %s14, 4
      %s24 = sphi 0, %s26
      %s27 = sphi 0, %s24
      %s28 = sphi 0, %s27
      %s44 = sphi 0, %s28
      %s48 = sphi 0, %s48
      %s50 = sphi 0, %s48
      %s51 = sphi 0, %s50
      %s65 = sphi 0, %s51
      %s69 = sphi 0, %s69
      %s71 = sphi 0, %s69
      %s72 = sphi 0, %s71
      %s86 = sphi 0, %s72
      %s92 = sphi 0, %s94
      %s95 = sphi 0, %s92
      %s96 = sphi 0, %s95
      %s112 = sphi 0, %s96
      %s118 = sphi 0, %s120
      %s121 = sphi 0, %s118
      %s122 = sphi 0, %s121
      %s138 = sphi 0, %s122
    $region4: #{tpu_custom_call.1} parent=1 // loop_header_branch
      %17 = sbr.rel (%p15) target = $region8
    $region5: #{tpu_custom_call.1} parent=1 // loop_body
      %s19 = ssub.s32 %s14, 1
      %s20 = ssub.s32 %s14, 2
      %s21 = sadd.s32 %s14, 1
      %s22 = ssub.s32 %s14, %s21
      %p23 = scmp.eq.s32.totalorder %s22, 0
      %s25 = sadd.s32 %s24, 1
      %s26 = scalar_select %p23, %s24, %s25
      %p29 = pneg %p23
      %p30 = scmp.eq.s32.totalorder %s14, 1
      %p31 = por %p29, %p30
      %p32 = scmp.ne.s32.totalorder %s24, %s27
      %p33 = scmp.eq.s32.totalorder %s14, 0
      %p34 = por %p32, %p33
      %p35 = scmp.ne.s32.totalorder %s24, %s27
      %p36 = scmp.eq.s32.totalorder %s19, 1
      %p37 = por %p35, %p36
      %p38 = scmp.ne.s32.totalorder %s27, %s28
      %p39 = scmp.eq.s32.totalorder %s19, 0
      %p40 = por %p38, %p39
      %p41 = scmp.ne.s32.totalorder %s27, %s28
      %p42 = scmp.eq.s32.totalorder %s20, 1
      %p43 = por %p41, %p42
      %p45 = scmp.ne.s32.totalorder %s28, %s44
      %p46 = scmp.eq.s32.totalorder %s20, 0
      %p47 = por %p45, %p46
      %s49 = sadd.s32 %s48, 1
      %p52 = scmp.eq.s32.totalorder %s14, 1
      %p53 = scmp.ne.s32.totalorder %s48, %s50
      %p54 = scmp.eq.s32.totalorder %s14, 0
      %p55 = por %p53, %p54
      %p56 = scmp.ne.s32.totalorder %s48, %s50
      %p57 = scmp.eq.s32.totalorder %s19, 1
      %p58 = por %p56, %p57
      %p59 = scmp.ne.s32.totalorder %s50, %s51
      %p60 = scmp.eq.s32.totalorder %s19, 0
      %p61 = por %p59, %p60
      %p62 = scmp.ne.s32.totalorder %s50, %s51
      %p63 = scmp.eq.s32.totalorder %s20, 1
      %p64 = por %p62, %p63
      %p66 = scmp.ne.s32.totalorder %s51, %s65
      %p67 = scmp.eq.s32.totalorder %s20, 0
      %p68 = por %p66, %p67
      %s70 = sadd.s32 %s69, 1
      %p73 = scmp.eq.s32.totalorder %s14, 1
      %p74 = scmp.ne.s32.totalorder %s69, %s71
      %p75 = scmp.eq.s32.totalorder %s14, 0
      %p76 = por %p74, %p75
      %p77 = scmp.ne.s32.totalorder %s69, %s71
      %p78 = scmp.eq.s32.totalorder %s19, 1
      %p79 = por %p77, %p78
      %p80 = scmp.ne.s32.totalorder %s71, %s72
      %p81 = scmp.eq.s32.totalorder %s19, 0
      %p82 = por %p80, %p81
      %p83 = scmp.ne.s32.totalorder %s71, %s72
      %p84 = scmp.eq.s32.totalorder %s20, 1
      %p85 = por %p83, %p84
      %p87 = scmp.ne.s32.totalorder %s72, %s86
      %p88 = scmp.eq.s32.totalorder %s20, 0
      %p89 = por %p87, %p88
      %s90 = ssub.s32 %s14, %s21
      %p91 = scmp.eq.s32.totalorder %s90, 0
      %s93 = sadd.s32 %s92, 1
      %s94 = scalar_select %p91, %s92, %s93
      %p97 = pneg %p91
      %p98 = scmp.eq.s32.totalorder %s14, 1
      %p99 = por %p97, %p98
      %p100 = scmp.ne.s32.totalorder %s92, %s95
      %p101 = scmp.eq.s32.totalorder %s14, 0
      %p102 = por %p100, %p101
      %p103 = scmp.ne.s32.totalorder %s92, %s95
      %p104 = scmp.eq.s32.totalorder %s19, 1
      %p105 = por %p103, %p104
      %p106 = scmp.ne.s32.totalorder %s95, %s96
      %p107 = scmp.eq.s32.totalorder %s19, 0
      %p108 = por %p106, %p107
      %p109 = scmp.ne.s32.totalorder %s95, %s96
      %p110 = scmp.eq.s32.totalorder %s20, 1
      %p111 = por %p109, %p110
      %p113 = scmp.ne.s32.totalorder %s96, %s112
      %p114 = scmp.eq.s32.totalorder %s20, 0
      %p115 = por %p113, %p114
      %s116 = ssub.s32 %s14, %s21
      %p117 = scmp.eq.s32.totalorder %s116, 0
      %s119 = sadd.s32 %s118, 1
      %s120 = scalar_select %p117, %s118, %s119
      %p123 = pneg %p117
      %p124 = scmp.eq.s32.totalorder %s14, 1
      %p125 = por %p123, %p124
      %p126 = scmp.ne.s32.totalorder %s118, %s121
      %p127 = scmp.eq.s32.totalorder %s14, 0
      %p128 = por %p126, %p127
      %p129 = scmp.ne.s32.totalorder %s118, %s121
      %p130 = scmp.eq.s32.totalorder %s19, 1
      %p131 = por %p129, %p130
      %p132 = scmp.ne.s32.totalorder %s121, %s122
      %p133 = scmp.eq.s32.totalorder %s19, 0
      %p134 = por %p132, %p133
      %p135 = scmp.ne.s32.totalorder %s121, %s122
      %p136 = scmp.eq.s32.totalorder %s20, 1
      %p137 = por %p135, %p136
      %p139 = scmp.ne.s32.totalorder %s122, %s138
      %p140 = scmp.eq.s32.totalorder %s20, 0
      %p141 = por %p139, %p140
      %p142 = scmp.le.s32.totalorder 1, %s14
      %p143 = scmp.lt.s32.totalorder %s14, 3
      %p144 = pnand %p142, %p143
      %p145 = pneg %p144
      // Predicated region
      $region9: #{tpu_custom_call.1} parent=5 // pred_check
        _
      $region10: #{tpu_custom_call.1} parent=5 // pred_check_branch
        %147 = sbr.rel (%p144) target = $region12
      $region11: #{tpu_custom_call.1} parent=5 // pred_region
        %s148 = ssub.s32 %s14, 1
        // Predicated region
        $region13: #{tpu_custom_call.1} parent=11 // pred_check
          %p149 = pneg %p61
        $region14: #{tpu_custom_call.1} parent=11 // pred_check_branch
          %151 = sbr.rel (%p149) target = $region16
        $region15: #{tpu_custom_call.1} parent=11 // pred_region
          _
        $region16: #{tpu_custom_call.1} parent=11 // pred_fallthru
          _
        // Predicated region
        $region17: #{tpu_custom_call.1} parent=11 // pred_check
          %p152 = pneg %p82
        $region18: #{tpu_custom_call.1} parent=11 // pred_check_branch
          %154 = sbr.rel (%p152) target = $region20
        $region19: #{tpu_custom_call.1} parent=11 // pred_region
          _
        $region20: #{tpu_custom_call.1} parent=11 // pred_fallthru
          _
      $region12: #{tpu_custom_call.1} parent=5 // pred_fallthru
        _
      %p155 = scmp.lt.s32.totalorder %s14, 2
      // Predicated region
      $region21: #{tpu_custom_call.1} parent=5 // pred_check
        %p156 = pneg %p155
      $region22: #{tpu_custom_call.1} parent=5 // pred_check_branch
        %158 = sbr.rel (%p156) target = $region24
      $region23: #{tpu_custom_call.1} parent=5 // pred_region
        // Predicated region
        $region25: #{tpu_custom_call.1} parent=23 // pred_check
          %p159 = pneg %p34
        $region26: #{tpu_custom_call.1} parent=23 // pred_check_branch
          %161 = sbr.rel (%p159) target = $region28
        $region27: #{tpu_custom_call.1} parent=23 // pred_region
          %p162 = scmp.lt.s32.totalorder %s14, 1
          %s163 = scalar_select %p162, %s14, 1
          %s164 = smul.addr %s163, 32
          %s165 = smul.addr %s164, 8
          %s166 = scalar_lea.vmem %s0, %s165
        $region28: #{tpu_custom_call.1} parent=23 // pred_fallthru
          _
      $region24: #{tpu_custom_call.1} parent=5 // pred_fallthru
        _
      %p167 = scmp.le.s32.totalorder 1, %s14
      %p168 = scmp.lt.s32.totalorder %s14, 3
      %p169 = pnand %p167, %p168
      %p170 = pneg %p169
      // Predicated region
      $region29: #{tpu_custom_call.1} parent=5 // pred_check
        _
      $region30: #{tpu_custom_call.1} parent=5 // pred_check_branch
        %172 = sbr.rel (%p169) target = $region32
      $region31: #{tpu_custom_call.1} parent=5 // pred_region
        %s173 = ssub.s32 %s14, 1
        %p174 = scmp.lt.s32.totalorder %s19, 1
        %s175 = scalar_select %p174, %s19, 1
        %s176 = smul.addr %s175, 32
        %s177 = smul.addr %s176, 8
        %s178 = scalar_lea.vmem %s0, %s177
        %p179 = pneg %p40
        %p180 = pneg %p37
        %p181 = pneg %p61
        %p182 = pneg %p58
        %p183 = pneg %p82
        %p184 = pneg %p79
        %p185 = pneg %p108
        %p186 = pneg %p105
        %p187 = scmp.lt.s32.totalorder %s19, 1
        %s188 = scalar_select %p187, %s19, 1
        %s189 = smul.addr %s188, 32
        %s190 = smul.addr %s189, 8
        %s191 = scalar_lea.vmem %s3, %s190
        %p192 = pneg %p134
        %p193 = pneg %p131
        %s194 = sand.u32 %s121, 1
        %s195 = scalar_lea.sflag [#allocation3], %s194
        %s196 = sand.u32 %s121, 1
        %s197 = smul.addr %s196, 2
        %s198 = scalar_lea.vmem [#allocation2], %s197
        %p199 = scmp.lt.s32.totalorder %s19, 1
        %s200 = scalar_select %p199, %s19, 1
        %s201 = smul.addr %s200, 32
        %s202 = smul.addr %s201, 8
        %s203 = scalar_lea.vmem %s0, %s202
        %p204 = scmp.lt.s32.totalorder %s19, 1
        %s205 = scalar_select %p204, %s19, 1
        %s206 = smul.addr %s205, 32
        %s207 = smul.addr %s206, 8
        %s208 = scalar_lea.vmem %s3, %s207
        %v209 = vld [vmem:[%s203] sm:$0xff]
        %v210 = vld [vmem:[%s203 + $0x8] sm:$0xff]
        %v211 = vld [vmem:[%s203 + $0x10] sm:$0xff]
        %v212 = vld [vmem:[%s203 + $0x18] sm:$0xff]
        %v213 = vld [vmem:[%s203 + $0x20] sm:$0xff]
        %v214 = vld [vmem:[%s203 + $0x28] sm:$0xff]
        %v215 = vld [vmem:[%s203 + $0x30] sm:$0xff]
        %v216 = vld [vmem:[%s203 + $0x38] sm:$0xff]
        %v217 = vld [vmem:[%s203 + $0x40] sm:$0xff]
        %v218 = vld [vmem:[%s203 + $0x48] sm:$0xff]
        %v219 = vld [vmem:[%s203 + $0x50] sm:$0xff]
        %v220 = vld [vmem:[%s203 + $0x58] sm:$0xff]
        %v221 = vld [vmem:[%s203 + $0x60] sm:$0xff]
        %v222 = vld [vmem:[%s203 + $0x68] sm:$0xff]
        %v223 = vld [vmem:[%s203 + $0x70] sm:$0xff]
        %v224 = vld [vmem:[%s203 + $0x78] sm:$0xff]
        %v225 = vld [vmem:[%s203 + $0x80] sm:$0xff]
        %v226 = vld [vmem:[%s203 + $0x88] sm:$0xff]
        %v227 = vld [vmem:[%s203 + $0x90] sm:$0xff]
        %v228 = vld [vmem:[%s203 + $0x98] sm:$0xff]
        %v229 = vld [vmem:[%s203 + $0xa0] sm:$0xff]
        %v230 = vld [vmem:[%s203 + $0xa8] sm:$0xff]
        %v231 = vld [vmem:[%s203 + $0xb0] sm:$0xff]
        %v232 = vld [vmem:[%s203 + $0xb8] sm:$0xff]
        %v233 = vld [vmem:[%s203 + $0xc0] sm:$0xff]
        %v234 = vld [vmem:[%s203 + $0xc8] sm:$0xff]
        %v235 = vld [vmem:[%s203 + $0xd0] sm:$0xff]
        %v236 = vld [vmem:[%s203 + $0xd8] sm:$0xff]
        %v237 = vld [vmem:[%s203 + $0xe0] sm:$0xff]
        %v238 = vld [vmem:[%s203 + $0xe8] sm:$0xff]
        %v239 = vld [vmem:[%s203 + $0xf0] sm:$0xff]
        %v240 = vld [vmem:[%s203 + $0xf8] sm:$0xff]
        %vm274 = vcmask 1040384
        %v275 = vrot.slane 0.0, 7
        %v276 = vsel %vm274, %v275, %v275
        %v277 = vrot.slane %v209, 7
        %v278 = vrot.slane %v210, 7
        %v279 = vsel %vm274, %v277, %v278
        %v280 = vrot.slane %v211, 7
        %v281 = vrot.slane %v212, 7
        %v282 = vsel %vm274, %v280, %v281
        %v283 = vrot.slane %v213, 7
        %v284 = vrot.slane %v214, 7
        %v285 = vsel %vm274, %v283, %v284
        %v286 = vrot.slane %v215, 7
        %v287 = vrot.slane %v216, 7
        %v288 = vsel %vm274, %v286, %v287
        %v289 = vrot.slane %v217, 7
        %v290 = vrot.slane %v218, 7
        %v291 = vsel %vm274, %v289, %v290
        %v292 = vrot.slane %v219, 7
        %v293 = vrot.slane %v220, 7
        %v294 = vsel %vm274, %v292, %v293
        %v295 = vrot.slane %v221, 7
        %v296 = vrot.slane %v222, 7
        %v297 = vsel %vm274, %v295, %v296
        %v298 = vrot.slane %v223, 7
        %v299 = vrot.slane %v224, 7
        %v300 = vsel %vm274, %v298, %v299
        %v301 = vrot.slane %v225, 7
        %v302 = vrot.slane %v226, 7
        %v303 = vsel %vm274, %v301, %v302
        %v304 = vrot.slane %v227, 7
        %v305 = vrot.slane %v228, 7
        %v306 = vsel %vm274, %v304, %v305
        %v307 = vrot.slane %v229, 7
        %v308 = vrot.slane %v230, 7
        %v309 = vsel %vm274, %v307, %v308
        %v310 = vrot.slane %v231, 7
        %v311 = vrot.slane %v232, 7
        %v312 = vsel %vm274, %v310, %v311
        %v313 = vrot.slane %v233, 7
        %v314 = vrot.slane %v234, 7
        %v315 = vsel %vm274, %v313, %v314
        %v316 = vrot.slane %v235, 7
        %v317 = vrot.slane %v236, 7
        %v318 = vsel %vm274, %v316, %v317
        %v319 = vrot.slane %v237, 7
        %v320 = vrot.slane %v238, 7
        %v321 = vsel %vm274, %v319, %v320
        %v322 = vrot.slane %v239, 7
        %v323 = vrot.slane %v240, 7
        %v324 = vsel %vm274, %v322, %v323
        %v374 = vsel %vm274, 0.0, %v275
        %v375 = vsel %vm274, 0.0, %v277
        %v376 = vsel %vm274, 0.0, %v280
        %v377 = vsel %vm274, 0.0, %v283
        %v378 = vsel %vm274, 0.0, %v286
        %v379 = vsel %vm274, 0.0, %v289
        %v380 = vsel %vm274, 0.0, %v292
        %v381 = vsel %vm274, 0.0, %v295
        %v382 = vsel %vm274, 0.0, %v298
        %v383 = vsel %vm274, 0.0, %v301
        %v384 = vsel %vm274, 0.0, %v304
        %v385 = vsel %vm274, 0.0, %v307
        %v386 = vsel %vm274, 0.0, %v310
        %v387 = vsel %vm274, 0.0, %v313
        %v388 = vsel %vm274, 0.0, %v316
        %v389 = vsel %vm274, 0.0, %v319
        %v390 = vsel %vm274, 0.0, %v322
        %v391 = vsel %vm274, %v275, 0.0
        %v392 = vsel %vm274, %v278, 0.0
        %v393 = vsel %vm274, %v281, 0.0
        %v394 = vsel %vm274, %v284, 0.0
        %v395 = vsel %vm274, %v287, 0.0
        %v396 = vsel %vm274, %v290, 0.0
        %v397 = vsel %vm274, %v293, 0.0
        %v398 = vsel %vm274, %v296, 0.0
        %v399 = vsel %vm274, %v299, 0.0
        %v400 = vsel %vm274, %v302, 0.0
        %v401 = vsel %vm274, %v305, 0.0
        %v402 = vsel %vm274, %v308, 0.0
        %v403 = vsel %vm274, %v311, 0.0
        %v404 = vsel %vm274, %v314, 0.0
        %v405 = vsel %vm274, %v317, 0.0
        %v406 = vsel %vm274, %v320, 0.0
        %v407 = vsel %vm274, %v323, 0.0
        %vm440 = vcmask 1046528
        %v441 = vrot.slane %v374, 1
        %v442 = vrot.slane %v276, 1
        %v443 = vsel %vm440, %v441, %v442
        %v444 = vrot.slane %v391, 1
        %v445 = vsel %vm440, %v442, %v444
        %v446 = vrot.slane %v375, 1
        %v447 = vrot.slane %v279, 1
        %v448 = vsel %vm440, %v446, %v447
        %v449 = vrot.slane %v392, 1
        %v450 = vsel %vm440, %v447, %v449
        %v451 = vrot.slane %v376, 1
        %v452 = vrot.slane %v282, 1
        %v453 = vsel %vm440, %v451, %v452
        %v454 = vrot.slane %v393, 1
        %v455 = vsel %vm440, %v452, %v454
        %v456 = vrot.slane %v377, 1
        %v457 = vrot.slane %v285, 1
        %v458 = vsel %vm440, %v456, %v457
        %v459 = vrot.slane %v394, 1
        %v460 = vsel %vm440, %v457, %v459
        %v461 = vrot.slane %v378, 1
        %v462 = vrot.slane %v288, 1
        %v463 = vsel %vm440, %v461, %v462
        %v464 = vrot.slane %v395, 1
        %v465 = vsel %vm440, %v462, %v464
        %v466 = vrot.slane %v379, 1
        %v467 = vrot.slane %v291, 1
        %v468 = vsel %vm440, %v466, %v467
        %v469 = vrot.slane %v396, 1
        %v470 = vsel %vm440, %v467, %v469
        %v471 = vrot.slane %v380, 1
        %v472 = vrot.slane %v294, 1
        %v473 = vsel %vm440, %v471, %v472
        %v474 = vrot.slane %v397, 1
        %v475 = vsel %vm440, %v472, %v474
        %v476 = vrot.slane %v381, 1
        %v477 = vrot.slane %v297, 1
        %v478 = vsel %vm440, %v476, %v477
        %v479 = vrot.slane %v398, 1
        %v480 = vsel %vm440, %v477, %v479
        %v481 = vrot.slane %v382, 1
        %v482 = vrot.slane %v300, 1
        %v483 = vsel %vm440, %v481, %v482
        %v484 = vrot.slane %v399, 1
        %v485 = vsel %vm440, %v482, %v484
        %v486 = vrot.slane %v383, 1
        %v487 = vrot.slane %v303, 1
        %v488 = vsel %vm440, %v486, %v487
        %v489 = vrot.slane %v400, 1
        %v490 = vsel %vm440, %v487, %v489
        %v491 = vrot.slane %v384, 1
        %v492 = vrot.slane %v306, 1
        %v493 = vsel %vm440, %v491, %v492
        %v494 = vrot.slane %v401, 1
        %v495 = vsel %vm440, %v492, %v494
        %v496 = vrot.slane %v385, 1
        %v497 = vrot.slane %v309, 1
        %v498 = vsel %vm440, %v496, %v497
        %v499 = vrot.slane %v402, 1
        %v500 = vsel %vm440, %v497, %v499
        %v501 = vrot.slane %v386, 1
        %v502 = vrot.slane %v312, 1
        %v503 = vsel %vm440, %v501, %v502
        %v504 = vrot.slane %v403, 1
        %v505 = vsel %vm440, %v502, %v504
        %v506 = vrot.slane %v387, 1
        %v507 = vrot.slane %v315, 1
        %v508 = vsel %vm440, %v506, %v507
        %v509 = vrot.slane %v404, 1
        %v510 = vsel %vm440, %v507, %v509
        %v511 = vrot.slane %v388, 1
        %v512 = vrot.slane %v318, 1
        %v513 = vsel %vm440, %v511, %v512
        %v514 = vrot.slane %v405, 1
        %v515 = vsel %vm440, %v512, %v514
        %v516 = vrot.slane %v389, 1
        %v517 = vrot.slane %v321, 1
        %v518 = vsel %vm440, %v516, %v517
        %v519 = vrot.slane %v406, 1
        %v520 = vsel %vm440, %v517, %v519
        %vm521 = vcmask 1045504
        %v522 = vrot.slane %v374, 2
        %v523 = vrot.slane %v276, 2
        %v524 = vsel %vm521, %v522, %v523
        %v525 = vrot.slane %v391, 2
        %v526 = vsel %vm521, %v523, %v525
        %v527 = vrot.slane %v375, 2
        %v528 = vrot.slane %v279, 2
        %v529 = vsel %vm521, %v527, %v528
        %v530 = vrot.slane %v392, 2
        %v531 = vsel %vm521, %v528, %v530
        %v532 = vrot.slane %v376, 2
        %v533 = vrot.slane %v282, 2
        %v534 = vsel %vm521, %v532, %v533
        %v535 = vrot.slane %v393, 2
        %v536 = vsel %vm521, %v533, %v535
        %v537 = vrot.slane %v377, 2
        %v538 = vrot.slane %v285, 2
        %v539 = vsel %vm521, %v537, %v538
        %v540 = vrot.slane %v394, 2
        %v541 = vsel %vm521, %v538, %v540
        %v542 = vrot.slane %v378, 2
        %v543 = vrot.slane %v288, 2
        %v544 = vsel %vm521, %v542, %v543
        %v545 = vrot.slane %v395, 2
        %v546 = vsel %vm521, %v543, %v545
        %v547 = vrot.slane %v379, 2
        %v548 = vrot.slane %v291, 2
        %v549 = vsel %vm521, %v547, %v548
        %v550 = vrot.slane %v396, 2
        %v551 = vsel %vm521, %v548, %v550
        %v552 = vrot.slane %v380, 2
        %v553 = vrot.slane %v294, 2
        %v554 = vsel %vm521, %v552, %v553
        %v555 = vrot.slane %v397, 2
        %v556 = vsel %vm521, %v553, %v555
        %v557 = vrot.slane %v381, 2
        %v558 = vrot.slane %v297, 2
        %v559 = vsel %vm521, %v557, %v558
        %v560 = vrot.slane %v398, 2
        %v561 = vsel %vm521, %v558, %v560
        %v562 = vrot.slane %v382, 2
        %v563 = vrot.slane %v300, 2
        %v564 = vsel %vm521, %v562, %v563
        %v565 = vrot.slane %v399, 2
        %v566 = vsel %vm521, %v563, %v565
        %v567 = vrot.slane %v383, 2
        %v568 = vrot.slane %v303, 2
        %v569 = vsel %vm521, %v567, %v568
        %v570 = vrot.slane %v400, 2
        %v571 = vsel %vm521, %v568, %v570
        %v572 = vrot.slane %v384, 2
        %v573 = vrot.slane %v306, 2
        %v574 = vsel %vm521, %v572, %v573
        %v575 = vrot.slane %v401, 2
        %v576 = vsel %vm521, %v573, %v575
        %v577 = vrot.slane %v385, 2
        %v578 = vrot.slane %v309, 2
        %v579 = vsel %vm521, %v577, %v578
        %v580 = vrot.slane %v402, 2
        %v581 = vsel %vm521, %v578, %v580
        %v582 = vrot.slane %v386, 2
        %v583 = vrot.slane %v312, 2
        %v584 = vsel %vm521, %v582, %v583
        %v585 = vrot.slane %v403, 2
        %v586 = vsel %vm521, %v583, %v585
        %v587 = vrot.slane %v387, 2
        %v588 = vrot.slane %v315, 2
        %v589 = vsel %vm521, %v587, %v588
        %v590 = vrot.slane %v404, 2
        %v591 = vsel %vm521, %v588, %v590
        %v592 = vrot.slane %v388, 2
        %v593 = vrot.slane %v318, 2
        %v594 = vsel %vm521, %v592, %v593
        %v595 = vrot.slane %v405, 2
        %v596 = vsel %vm521, %v593, %v595
        %v597 = vrot.slane %v389, 2
        %v598 = vrot.slane %v321, 2
        %v599 = vsel %vm521, %v597, %v598
        %v600 = vrot.slane %v406, 2
        %v601 = vsel %vm521, %v598, %v600
        %v604 = vrot.slane %v390, 1
        %v605 = vrot.slane %v324, 1
        %v606 = vsel %vm440, %v604, %v605
        %v607 = vrot.slane %v407, 1
        %v608 = vsel %vm440, %v605, %v607
        %v609 = vrot.slane %v390, 2
        %v610 = vrot.slane %v324, 2
        %v611 = vsel %vm521, %v609, %v610
        %v612 = vrot.slane %v407, 2
        %v613 = vsel %vm521, %v610, %v612
        %614 = vrot.lane.b32.xlu0 %v443, 4
        %v615 = vpop.permute.xlu0 %614
        %616 = vrot.lane.b32.xlu0 %v445, 4
        %v617 = vpop.permute.xlu0 %616
        %618 = vrot.lane.b32.xlu0 %v448, 4
        %v619 = vpop.permute.xlu0 %618
        %620 = vrot.lane.b32.xlu0 %v450, 4
        %v621 = vpop.permute.xlu0 %620
        %622 = vrot.lane.b32.xlu0 %v453, 4
        %v623 = vpop.permute.xlu0 %622
        %624 = vrot.lane.b32.xlu0 %v455, 4
        %v625 = vpop.permute.xlu0 %624
        %626 = vrot.lane.b32.xlu0 %v458, 4
        %v627 = vpop.permute.xlu0 %626
        %628 = vrot.lane.b32.xlu0 %v460, 4
        %v629 = vpop.permute.xlu0 %628
        %630 = vrot.lane.b32.xlu0 %v463, 4
        %v631 = vpop.permute.xlu0 %630
        %632 = vrot.lane.b32.xlu0 %v465, 4
        %v633 = vpop.permute.xlu0 %632
        %634 = vrot.lane.b32.xlu0 %v468, 4
        %v635 = vpop.permute.xlu0 %634
        %636 = vrot.lane.b32.xlu0 %v470, 4
        %v637 = vpop.permute.xlu0 %636
        %638 = vrot.lane.b32.xlu0 %v473, 4
        %v639 = vpop.permute.xlu0 %638
        %640 = vrot.lane.b32.xlu0 %v475, 4
        %v641 = vpop.permute.xlu0 %640
        %642 = vrot.lane.b32.xlu0 %v478, 4
        %v643 = vpop.permute.xlu0 %642
        %644 = vrot.lane.b32.xlu0 %v480, 4
        %v645 = vpop.permute.xlu0 %644
        %646 = vrot.lane.b32.xlu0 %v483, 4
        %v647 = vpop.permute.xlu0 %646
        %648 = vrot.lane.b32.xlu0 %v485, 4
        %v649 = vpop.permute.xlu0 %648
        %650 = vrot.lane.b32.xlu0 %v488, 4
        %v651 = vpop.permute.xlu0 %650
        %652 = vrot.lane.b32.xlu0 %v490, 4
        %v653 = vpop.permute.xlu0 %652
        %654 = vrot.lane.b32.xlu0 %v493, 4
        %v655 = vpop.permute.xlu0 %654
        %656 = vrot.lane.b32.xlu0 %v495, 4
        %v657 = vpop.permute.xlu0 %656
        %658 = vrot.lane.b32.xlu0 %v498, 4
        %v659 = vpop.permute.xlu0 %658
        %660 = vrot.lane.b32.xlu0 %v500, 4
        %v661 = vpop.permute.xlu0 %660
        %662 = vrot.lane.b32.xlu0 %v503, 4
        %v663 = vpop.permute.xlu0 %662
        %664 = vrot.lane.b32.xlu0 %v505, 4
        %v665 = vpop.permute.xlu0 %664
        %666 = vrot.lane.b32.xlu0 %v508, 4
        %v667 = vpop.permute.xlu0 %666
        %668 = vrot.lane.b32.xlu0 %v510, 4
        %v669 = vpop.permute.xlu0 %668
        %670 = vrot.lane.b32.xlu0 %v513, 4
        %v671 = vpop.permute.xlu0 %670
        %672 = vrot.lane.b32.xlu0 %v515, 4
        %v673 = vpop.permute.xlu0 %672
        %674 = vrot.lane.b32.xlu0 %v518, 4
        %v675 = vpop.permute.xlu0 %674
        %676 = vrot.lane.b32.xlu0 %v520, 4
        %v677 = vpop.permute.xlu0 %676
        %710 = vrot.lane.b32.xlu0 %v524, 8
        %v711 = vpop.permute.xlu0 %710
        %712 = vrot.lane.b32.xlu0 %v526, 8
        %v713 = vpop.permute.xlu0 %712
        %714 = vrot.lane.b32.xlu0 %v529, 8
        %v715 = vpop.permute.xlu0 %714
        %716 = vrot.lane.b32.xlu0 %v531, 8
        %v717 = vpop.permute.xlu0 %716
        %718 = vrot.lane.b32.xlu0 %v534, 8
        %v719 = vpop.permute.xlu0 %718
        %720 = vrot.lane.b32.xlu0 %v536, 8
        %v721 = vpop.permute.xlu0 %720
        %722 = vrot.lane.b32.xlu0 %v539, 8
        %v723 = vpop.permute.xlu0 %722
        %724 = vrot.lane.b32.xlu0 %v541, 8
        %v725 = vpop.permute.xlu0 %724
        %726 = vrot.lane.b32.xlu0 %v544, 8
        %v727 = vpop.permute.xlu0 %726
        %728 = vrot.lane.b32.xlu0 %v546, 8
        %v729 = vpop.permute.xlu0 %728
        %730 = vrot.lane.b32.xlu0 %v549, 8
        %v731 = vpop.permute.xlu0 %730
        %732 = vrot.lane.b32.xlu0 %v551, 8
        %v733 = vpop.permute.xlu0 %732
        %734 = vrot.lane.b32.xlu0 %v554, 8
        %v735 = vpop.permute.xlu0 %734
        %736 = vrot.lane.b32.xlu0 %v556, 8
        %v737 = vpop.permute.xlu0 %736
        %738 = vrot.lane.b32.xlu0 %v559, 8
        %v739 = vpop.permute.xlu0 %738
        %740 = vrot.lane.b32.xlu0 %v561, 8
        %v741 = vpop.permute.xlu0 %740
        %742 = vrot.lane.b32.xlu0 %v564, 8
        %v743 = vpop.permute.xlu0 %742
        %744 = vrot.lane.b32.xlu0 %v566, 8
        %v745 = vpop.permute.xlu0 %744
        %746 = vrot.lane.b32.xlu0 %v569, 8
        %v747 = vpop.permute.xlu0 %746
        %748 = vrot.lane.b32.xlu0 %v571, 8
        %v749 = vpop.permute.xlu0 %748
        %750 = vrot.lane.b32.xlu0 %v574, 8
        %v751 = vpop.permute.xlu0 %750
        %752 = vrot.lane.b32.xlu0 %v576, 8
        %v753 = vpop.permute.xlu0 %752
        %754 = vrot.lane.b32.xlu0 %v579, 8
        %v755 = vpop.permute.xlu0 %754
        %756 = vrot.lane.b32.xlu0 %v581, 8
        %v757 = vpop.permute.xlu0 %756
        %758 = vrot.lane.b32.xlu0 %v584, 8
        %v759 = vpop.permute.xlu0 %758
        %760 = vrot.lane.b32.xlu0 %v586, 8
        %v761 = vpop.permute.xlu0 %760
        %762 = vrot.lane.b32.xlu0 %v589, 8
        %v763 = vpop.permute.xlu0 %762
        %764 = vrot.lane.b32.xlu0 %v591, 8
        %v765 = vpop.permute.xlu0 %764
        %766 = vrot.lane.b32.xlu0 %v594, 8
        %v767 = vpop.permute.xlu0 %766
        %768 = vrot.lane.b32.xlu0 %v596, 8
        %v769 = vpop.permute.xlu0 %768
        %770 = vrot.lane.b32.xlu0 %v599, 8
        %v771 = vpop.permute.xlu0 %770
        %772 = vrot.lane.b32.xlu0 %v601, 8
        %v773 = vpop.permute.xlu0 %772
        %806 = vrot.lane.b32.xlu0 %v375, 12
        %v807 = vpop.permute.xlu0 %806
        %808 = vrot.lane.b32.xlu0 %v279, 12
        %v809 = vpop.permute.xlu0 %808
        %810 = vrot.lane.b32.xlu0 %v376, 12
        %v811 = vpop.permute.xlu0 %810
        %812 = vrot.lane.b32.xlu0 %v282, 12
        %v813 = vpop.permute.xlu0 %812
        %814 = vrot.lane.b32.xlu0 %v377, 12
        %v815 = vpop.permute.xlu0 %814
        %816 = vrot.lane.b32.xlu0 %v285, 12
        %v817 = vpop.permute.xlu0 %816
        %818 = vrot.lane.b32.xlu0 %v378, 12
        %v819 = vpop.permute.xlu0 %818
        %820 = vrot.lane.b32.xlu0 %v288, 12
        %v821 = vpop.permute.xlu0 %820
        %822 = vrot.lane.b32.xlu0 %v379, 12
        %v823 = vpop.permute.xlu0 %822
        %824 = vrot.lane.b32.xlu0 %v291, 12
        %v825 = vpop.permute.xlu0 %824
        %826 = vrot.lane.b32.xlu0 %v380, 12
        %v827 = vpop.permute.xlu0 %826
        %828 = vrot.lane.b32.xlu0 %v294, 12
        %v829 = vpop.permute.xlu0 %828
        %830 = vrot.lane.b32.xlu0 %v381, 12
        %v831 = vpop.permute.xlu0 %830
        %832 = vrot.lane.b32.xlu0 %v297, 12
        %v833 = vpop.permute.xlu0 %832
        %834 = vrot.lane.b32.xlu0 %v382, 12
        %v835 = vpop.permute.xlu0 %834
        %836 = vrot.lane.b32.xlu0 %v300, 12
        %v837 = vpop.permute.xlu0 %836
        %838 = vrot.lane.b32.xlu0 %v383, 12
        %v839 = vpop.permute.xlu0 %838
        %840 = vrot.lane.b32.xlu0 %v303, 12
        %v841 = vpop.permute.xlu0 %840
        %842 = vrot.lane.b32.xlu0 %v384, 12
        %v843 = vpop.permute.xlu0 %842
        %844 = vrot.lane.b32.xlu0 %v306, 12
        %v845 = vpop.permute.xlu0 %844
        %846 = vrot.lane.b32.xlu0 %v385, 12
        %v847 = vpop.permute.xlu0 %846
        %848 = vrot.lane.b32.xlu0 %v309, 12
        %v849 = vpop.permute.xlu0 %848
        %850 = vrot.lane.b32.xlu0 %v386, 12
        %v851 = vpop.permute.xlu0 %850
        %852 = vrot.lane.b32.xlu0 %v312, 12
        %v853 = vpop.permute.xlu0 %852
        %854 = vrot.lane.b32.xlu0 %v387, 12
        %v855 = vpop.permute.xlu0 %854
        %856 = vrot.lane.b32.xlu0 %v315, 12
        %v857 = vpop.permute.xlu0 %856
        %858 = vrot.lane.b32.xlu0 %v388, 12
        %v859 = vpop.permute.xlu0 %858
        %860 = vrot.lane.b32.xlu0 %v318, 12
        %v861 = vpop.permute.xlu0 %860
        %862 = vrot.lane.b32.xlu0 %v389, 12
        %v863 = vpop.permute.xlu0 %862
        %864 = vrot.lane.b32.xlu0 %v321, 12
        %v865 = vpop.permute.xlu0 %864
        %866 = vrot.lane.b32.xlu0 %v390, 12
        %v867 = vpop.permute.xlu0 %866
        %868 = vrot.lane.b32.xlu0 %v324, 12
        %v869 = vpop.permute.xlu0 %868
        %902 = vrot.lane.b32.xlu0 %v448, 16
        %v903 = vpop.permute.xlu0 %902
        %904 = vrot.lane.b32.xlu0 %v450, 16
        %v905 = vpop.permute.xlu0 %904
        %906 = vrot.lane.b32.xlu0 %v453, 16
        %v907 = vpop.permute.xlu0 %906
        %908 = vrot.lane.b32.xlu0 %v455, 16
        %v909 = vpop.permute.xlu0 %908
        %910 = vrot.lane.b32.xlu0 %v458, 16
        %v911 = vpop.permute.xlu0 %910
        %912 = vrot.lane.b32.xlu0 %v460, 16
        %v913 = vpop.permute.xlu0 %912
        %914 = vrot.lane.b32.xlu0 %v463, 16
        %v915 = vpop.permute.xlu0 %914
        %916 = vrot.lane.b32.xlu0 %v465, 16
        %v917 = vpop.permute.xlu0 %916
        %918 = vrot.lane.b32.xlu0 %v468, 16
        %v919 = vpop.permute.xlu0 %918
        %920 = vrot.lane.b32.xlu0 %v470, 16
        %v921 = vpop.permute.xlu0 %920
        %922 = vrot.lane.b32.xlu0 %v473, 16
        %v923 = vpop.permute.xlu0 %922
        %924 = vrot.lane.b32.xlu0 %v475, 16
        %v925 = vpop.permute.xlu0 %924
        %926 = vrot.lane.b32.xlu0 %v478, 16
        %v927 = vpop.permute.xlu0 %926
        %928 = vrot.lane.b32.xlu0 %v480, 16
        %v929 = vpop.permute.xlu0 %928
        %930 = vrot.lane.b32.xlu0 %v483, 16
        %v931 = vpop.permute.xlu0 %930
        %932 = vrot.lane.b32.xlu0 %v485, 16
        %v933 = vpop.permute.xlu0 %932
        %934 = vrot.lane.b32.xlu0 %v488, 16
        %v935 = vpop.permute.xlu0 %934
        %936 = vrot.lane.b32.xlu0 %v490, 16
        %v937 = vpop.permute.xlu0 %936
        %938 = vrot.lane.b32.xlu0 %v493, 16
        %v939 = vpop.permute.xlu0 %938
        %940 = vrot.lane.b32.xlu0 %v495, 16
        %v941 = vpop.permute.xlu0 %940
        %942 = vrot.lane.b32.xlu0 %v498, 16
        %v943 = vpop.permute.xlu0 %942
        %944 = vrot.lane.b32.xlu0 %v500, 16
        %v945 = vpop.permute.xlu0 %944
        %946 = vrot.lane.b32.xlu0 %v503, 16
        %v947 = vpop.permute.xlu0 %946
        %948 = vrot.lane.b32.xlu0 %v505, 16
        %v949 = vpop.permute.xlu0 %948
        %950 = vrot.lane.b32.xlu0 %v508, 16
        %v951 = vpop.permute.xlu0 %950
        %952 = vrot.lane.b32.xlu0 %v510, 16
        %v953 = vpop.permute.xlu0 %952
        %954 = vrot.lane.b32.xlu0 %v513, 16
        %v955 = vpop.permute.xlu0 %954
        %956 = vrot.lane.b32.xlu0 %v515, 16
        %v957 = vpop.permute.xlu0 %956
        %958 = vrot.lane.b32.xlu0 %v518, 16
        %v959 = vpop.permute.xlu0 %958
        %960 = vrot.lane.b32.xlu0 %v520, 16
        %v961 = vpop.permute.xlu0 %960
        %962 = vrot.lane.b32.xlu0 %v606, 16
        %v963 = vpop.permute.xlu0 %962
        %964 = vrot.lane.b32.xlu0 %v608, 16
        %v965 = vpop.permute.xlu0 %964
        %998 = vrot.lane.b32.xlu0 %v529, 20
        %v999 = vpop.permute.xlu0 %998
        %1000 = vrot.lane.b32.xlu0 %v531, 20
        %v1001 = vpop.permute.xlu0 %1000
        %1002 = vrot.lane.b32.xlu0 %v534, 20
        %v1003 = vpop.permute.xlu0 %1002
        %1004 = vrot.lane.b32.xlu0 %v536, 20
        %v1005 = vpop.permute.xlu0 %1004
        %1006 = vrot.lane.b32.xlu0 %v539, 20
        %v1007 = vpop.permute.xlu0 %1006
        %1008 = vrot.lane.b32.xlu0 %v541, 20
        %v1009 = vpop.permute.xlu0 %1008
        %1010 = vrot.lane.b32.xlu0 %v544, 20
        %v1011 = vpop.permute.xlu0 %1010
        %1012 = vrot.lane.b32.xlu0 %v546, 20
        %v1013 = vpop.permute.xlu0 %1012
        %1014 = vrot.lane.b32.xlu0 %v549, 20
        %v1015 = vpop.permute.xlu0 %1014
        %1016 = vrot.lane.b32.xlu0 %v551, 20
        %v1017 = vpop.permute.xlu0 %1016
        %1018 = vrot.lane.b32.xlu0 %v554, 20
        %v1019 = vpop.permute.xlu0 %1018
        %1020 = vrot.lane.b32.xlu0 %v556, 20
        %v1021 = vpop.permute.xlu0 %1020
        %1022 = vrot.lane.b32.xlu0 %v559, 20
        %v1023 = vpop.permute.xlu0 %1022
        %1024 = vrot.lane.b32.xlu0 %v561, 20
        %v1025 = vpop.permute.xlu0 %1024
        %1026 = vrot.lane.b32.xlu0 %v564, 20
        %v1027 = vpop.permute.xlu0 %1026
        %1028 = vrot.lane.b32.xlu0 %v566, 20
        %v1029 = vpop.permute.xlu0 %1028
        %1030 = vrot.lane.b32.xlu0 %v569, 20
        %v1031 = vpop.permute.xlu0 %1030
        %1032 = vrot.lane.b32.xlu0 %v571, 20
        %v1033 = vpop.permute.xlu0 %1032
        %1034 = vrot.lane.b32.xlu0 %v574, 20
        %v1035 = vpop.permute.xlu0 %1034
        %1036 = vrot.lane.b32.xlu0 %v576, 20
        %v1037 = vpop.permute.xlu0 %1036
        %1038 = vrot.lane.b32.xlu0 %v579, 20
        %v1039 = vpop.permute.xlu0 %1038
        %1040 = vrot.lane.b32.xlu0 %v581, 20
        %v1041 = vpop.permute.xlu0 %1040
        %1042 = vrot.lane.b32.xlu0 %v584, 20
        %v1043 = vpop.permute.xlu0 %1042
        %1044 = vrot.lane.b32.xlu0 %v586, 20
        %v1045 = vpop.permute.xlu0 %1044
        %1046 = vrot.lane.b32.xlu0 %v589, 20
        %v1047 = vpop.permute.xlu0 %1046
        %1048 = vrot.lane.b32.xlu0 %v591, 20
        %v1049 = vpop.permute.xlu0 %1048
        %1050 = vrot.lane.b32.xlu0 %v594, 20
        %v1051 = vpop.permute.xlu0 %1050
        %1052 = vrot.lane.b32.xlu0 %v596, 20
        %v1053 = vpop.permute.xlu0 %1052
        %1054 = vrot.lane.b32.xlu0 %v599, 20
        %v1055 = vpop.permute.xlu0 %1054
        %1056 = vrot.lane.b32.xlu0 %v601, 20
        %v1057 = vpop.permute.xlu0 %1056
        %1058 = vrot.lane.b32.xlu0 %v611, 20
        %v1059 = vpop.permute.xlu0 %1058
        %1060 = vrot.lane.b32.xlu0 %v613, 20
        %v1061 = vpop.permute.xlu0 %1060
        %1094 = vrot.lane.b32.xlu0 %v376, 24
        %v1095 = vpop.permute.xlu0 %1094
        %1096 = vrot.lane.b32.xlu0 %v282, 24
        %v1097 = vpop.permute.xlu0 %1096
        %1098 = vrot.lane.b32.xlu0 %v377, 24
        %v1099 = vpop.permute.xlu0 %1098
        %1100 = vrot.lane.b32.xlu0 %v285, 24
        %v1101 = vpop.permute.xlu0 %1100
        %1102 = vrot.lane.b32.xlu0 %v378, 24
        %v1103 = vpop.permute.xlu0 %1102
        %1104 = vrot.lane.b32.xlu0 %v288, 24
        %v1105 = vpop.permute.xlu0 %1104
        %1106 = vrot.lane.b32.xlu0 %v379, 24
        %v1107 = vpop.permute.xlu0 %1106
        %1108 = vrot.lane.b32.xlu0 %v291, 24
        %v1109 = vpop.permute.xlu0 %1108
        %1110 = vrot.lane.b32.xlu0 %v380, 24
        %v1111 = vpop.permute.xlu0 %1110
        %1112 = vrot.lane.b32.xlu0 %v294, 24
        %v1113 = vpop.permute.xlu0 %1112
        %1114 = vrot.lane.b32.xlu0 %v381, 24
        %v1115 = vpop.permute.xlu0 %1114
        %1116 = vrot.lane.b32.xlu0 %v297, 24
        %v1117 = vpop.permute.xlu0 %1116
        %1118 = vrot.lane.b32.xlu0 %v382, 24
        %v1119 = vpop.permute.xlu0 %1118
        %1120 = vrot.lane.b32.xlu0 %v300, 24
        %v1121 = vpop.permute.xlu0 %1120
        %1122 = vrot.lane.b32.xlu0 %v383, 24
        %v1123 = vpop.permute.xlu0 %1122
        %1124 = vrot.lane.b32.xlu0 %v303, 24
        %v1125 = vpop.permute.xlu0 %1124
        %1126 = vrot.lane.b32.xlu0 %v384, 24
        %v1127 = vpop.permute.xlu0 %1126
        %1128 = vrot.lane.b32.xlu0 %v306, 24
        %v1129 = vpop.permute.xlu0 %1128
        %1130 = vrot.lane.b32.xlu0 %v385, 24
        %v1131 = vpop.permute.xlu0 %1130
        %1132 = vrot.lane.b32.xlu0 %v309, 24
        %v1133 = vpop.permute.xlu0 %1132
        %1134 = vrot.lane.b32.xlu0 %v386, 24
        %v1135 = vpop.permute.xlu0 %1134
        %1136 = vrot.lane.b32.xlu0 %v312, 24
        %v1137 = vpop.permute.xlu0 %1136
        %1138 = vrot.lane.b32.xlu0 %v387, 24
        %v1139 = vpop.permute.xlu0 %1138
        %1140 = vrot.lane.b32.xlu0 %v315, 24
        %v1141 = vpop.permute.xlu0 %1140
        %1142 = vrot.lane.b32.xlu0 %v388, 24
        %v1143 = vpop.permute.xlu0 %1142
        %1144 = vrot.lane.b32.xlu0 %v318, 24
        %v1145 = vpop.permute.xlu0 %1144
        %1146 = vrot.lane.b32.xlu0 %v389, 24
        %v1147 = vpop.permute.xlu0 %1146
        %1148 = vrot.lane.b32.xlu0 %v321, 24
        %v1149 = vpop.permute.xlu0 %1148
        %1150 = vrot.lane.b32.xlu0 %v390, 24
        %v1151 = vpop.permute.xlu0 %1150
        %1152 = vrot.lane.b32.xlu0 %v324, 24
        %v1153 = vpop.permute.xlu0 %1152
        %1154 = vrot.lane.b32.xlu0 %v374, 24
        %v1155 = vpop.permute.xlu0 %1154
        %1156 = vrot.lane.b32.xlu0 %v276, 24
        %v1157 = vpop.permute.xlu0 %1156
        %1190 = vrot.lane.b32.xlu0 %v453, 28
        %v1191 = vpop.permute.xlu0 %1190
        %1192 = vrot.lane.b32.xlu0 %v455, 28
        %v1193 = vpop.permute.xlu0 %1192
        %1194 = vrot.lane.b32.xlu0 %v458, 28
        %v1195 = vpop.permute.xlu0 %1194
        %1196 = vrot.lane.b32.xlu0 %v460, 28
        %v1197 = vpop.permute.xlu0 %1196
        %1198 = vrot.lane.b32.xlu0 %v463, 28
        %v1199 = vpop.permute.xlu0 %1198
        %1200 = vrot.lane.b32.xlu0 %v465, 28
        %v1201 = vpop.permute.xlu0 %1200
        %1202 = vrot.lane.b32.xlu0 %v468, 28
        %v1203 = vpop.permute.xlu0 %1202
        %1204 = vrot.lane.b32.xlu0 %v470, 28
        %v1205 = vpop.permute.xlu0 %1204
        %1206 = vrot.lane.b32.xlu0 %v473, 28
        %v1207 = vpop.permute.xlu0 %1206
        %1208 = vrot.lane.b32.xlu0 %v475, 28
        %v1209 = vpop.permute.xlu0 %1208
        %1210 = vrot.lane.b32.xlu0 %v478, 28
        %v1211 = vpop.permute.xlu0 %1210
        %1212 = vrot.lane.b32.xlu0 %v480, 28
        %v1213 = vpop.permute.xlu0 %1212
        %1214 = vrot.lane.b32.xlu0 %v483, 28
        %v1215 = vpop.permute.xlu0 %1214
        %1216 = vrot.lane.b32.xlu0 %v485, 28
        %v1217 = vpop.permute.xlu0 %1216
        %1218 = vrot.lane.b32.xlu0 %v488, 28
        %v1219 = vpop.permute.xlu0 %1218
        %1220 = vrot.lane.b32.xlu0 %v490, 28
        %v1221 = vpop.permute.xlu0 %1220
        %1222 = vrot.lane.b32.xlu0 %v493, 28
        %v1223 = vpop.permute.xlu0 %1222
        %1224 = vrot.lane.b32.xlu0 %v495, 28
        %v1225 = vpop.permute.xlu0 %1224
        %1226 = vrot.lane.b32.xlu0 %v498, 28
        %v1227 = vpop.permute.xlu0 %1226
        %1228 = vrot.lane.b32.xlu0 %v500, 28
        %v1229 = vpop.permute.xlu0 %1228
        %1230 = vrot.lane.b32.xlu0 %v503, 28
        %v1231 = vpop.permute.xlu0 %1230
        %1232 = vrot.lane.b32.xlu0 %v505, 28
        %v1233 = vpop.permute.xlu0 %1232
        %1234 = vrot.lane.b32.xlu0 %v508, 28
        %v1235 = vpop.permute.xlu0 %1234
        %1236 = vrot.lane.b32.xlu0 %v510, 28
        %v1237 = vpop.permute.xlu0 %1236
        %1238 = vrot.lane.b32.xlu0 %v513, 28
        %v1239 = vpop.permute.xlu0 %1238
        %1240 = vrot.lane.b32.xlu0 %v515, 28
        %v1241 = vpop.permute.xlu0 %1240
        %1242 = vrot.lane.b32.xlu0 %v518, 28
        %v1243 = vpop.permute.xlu0 %1242
        %1244 = vrot.lane.b32.xlu0 %v520, 28
        %v1245 = vpop.permute.xlu0 %1244
        %1246 = vrot.lane.b32.xlu0 %v606, 28
        %v1247 = vpop.permute.xlu0 %1246
        %1248 = vrot.lane.b32.xlu0 %v608, 28
        %v1249 = vpop.permute.xlu0 %1248
        %1250 = vrot.lane.b32.xlu0 %v443, 28
        %v1251 = vpop.permute.xlu0 %1250
        %1252 = vrot.lane.b32.xlu0 %v445, 28
        %v1253 = vpop.permute.xlu0 %1252
        %1286 = vrot.lane.b32.xlu0 %v534, 32
        %v1287 = vpop.permute.xlu0 %1286
        %1288 = vrot.lane.b32.xlu0 %v536, 32
        %v1289 = vpop.permute.xlu0 %1288
        %1290 = vrot.lane.b32.xlu0 %v539, 32
        %v1291 = vpop.permute.xlu0 %1290
        %1292 = vrot.lane.b32.xlu0 %v541, 32
        %v1293 = vpop.permute.xlu0 %1292
        %1294 = vrot.lane.b32.xlu0 %v544, 32
        %v1295 = vpop.permute.xlu0 %1294
        %1296 = vrot.lane.b32.xlu0 %v546, 32
        %v1297 = vpop.permute.xlu0 %1296
        %1298 = vrot.lane.b32.xlu0 %v549, 32
        %v1299 = vpop.permute.xlu0 %1298
        %1300 = vrot.lane.b32.xlu0 %v551, 32
        %v1301 = vpop.permute.xlu0 %1300
        %1302 = vrot.lane.b32.xlu0 %v554, 32
        %v1303 = vpop.permute.xlu0 %1302
        %1304 = vrot.lane.b32.xlu0 %v556, 32
        %v1305 = vpop.permute.xlu0 %1304
        %1306 = vrot.lane.b32.xlu0 %v559, 32
        %v1307 = vpop.permute.xlu0 %1306
        %1308 = vrot.lane.b32.xlu0 %v561, 32
        %v1309 = vpop.permute.xlu0 %1308
        %1310 = vrot.lane.b32.xlu0 %v564, 32
        %v1311 = vpop.permute.xlu0 %1310
        %1312 = vrot.lane.b32.xlu0 %v566, 32
        %v1313 = vpop.permute.xlu0 %1312
        %1314 = vrot.lane.b32.xlu0 %v569, 32
        %v1315 = vpop.permute.xlu0 %1314
        %1316 = vrot.lane.b32.xlu0 %v571, 32
        %v1317 = vpop.permute.xlu0 %1316
        %1318 = vrot.lane.b32.xlu0 %v574, 32
        %v1319 = vpop.permute.xlu0 %1318
        %1320 = vrot.lane.b32.xlu0 %v576, 32
        %v1321 = vpop.permute.xlu0 %1320
        %1322 = vrot.lane.b32.xlu0 %v579, 32
        %v1323 = vpop.permute.xlu0 %1322
        %1324 = vrot.lane.b32.xlu0 %v581, 32
        %v1325 = vpop.permute.xlu0 %1324
        %1326 = vrot.lane.b32.xlu0 %v584, 32
        %v1327 = vpop.permute.xlu0 %1326
        %1328 = vrot.lane.b32.xlu0 %v586, 32
        %v1329 = vpop.permute.xlu0 %1328
        %1330 = vrot.lane.b32.xlu0 %v589, 32
        %v1331 = vpop.permute.xlu0 %1330
        %1332 = vrot.lane.b32.xlu0 %v591, 32
        %v1333 = vpop.permute.xlu0 %1332
        %1334 = vrot.lane.b32.xlu0 %v594, 32
        %v1335 = vpop.permute.xlu0 %1334
        %1336 = vrot.lane.b32.xlu0 %v596, 32
        %v1337 = vpop.permute.xlu0 %1336
        %1338 = vrot.lane.b32.xlu0 %v599, 32
        %v1339 = vpop.permute.xlu0 %1338
        %1340 = vrot.lane.b32.xlu0 %v601, 32
        %v1341 = vpop.permute.xlu0 %1340
        %1342 = vrot.lane.b32.xlu0 %v611, 32
        %v1343 = vpop.permute.xlu0 %1342
        %1344 = vrot.lane.b32.xlu0 %v613, 32
        %v1345 = vpop.permute.xlu0 %1344
        %1346 = vrot.lane.b32.xlu0 %v524, 32
        %v1347 = vpop.permute.xlu0 %1346
        %1348 = vrot.lane.b32.xlu0 %v526, 32
        %v1349 = vpop.permute.xlu0 %1348
        %vm1382 = vcmask 31744
        %v1383 = vsel %vm1382, %v374, %v615
        %v1384 = vsel %vm1382, %v276, %v617
        %v1385 = vsel %vm1382, %v375, %v619
        %v1386 = vsel %vm1382, %v279, %v621
        %v1387 = vsel %vm1382, %v376, %v623
        %v1388 = vsel %vm1382, %v282, %v625
        %v1389 = vsel %vm1382, %v377, %v627
        %v1390 = vsel %vm1382, %v285, %v629
        %v1391 = vsel %vm1382, %v378, %v631
        %v1392 = vsel %vm1382, %v288, %v633
        %v1393 = vsel %vm1382, %v379, %v635
        %v1394 = vsel %vm1382, %v291, %v637
        %v1395 = vsel %vm1382, %v380, %v639
        %v1396 = vsel %vm1382, %v294, %v641
        %v1397 = vsel %vm1382, %v381, %v643
        %v1398 = vsel %vm1382, %v297, %v645
        %v1399 = vsel %vm1382, %v382, %v647
        %v1400 = vsel %vm1382, %v300, %v649
        %v1401 = vsel %vm1382, %v383, %v651
        %v1402 = vsel %vm1382, %v303, %v653
        %v1403 = vsel %vm1382, %v384, %v655
        %v1404 = vsel %vm1382, %v306, %v657
        %v1405 = vsel %vm1382, %v385, %v659
        %v1406 = vsel %vm1382, %v309, %v661
        %v1407 = vsel %vm1382, %v386, %v663
        %v1408 = vsel %vm1382, %v312, %v665
        %v1409 = vsel %vm1382, %v387, %v667
        %v1410 = vsel %vm1382, %v315, %v669
        %v1411 = vsel %vm1382, %v388, %v671
        %v1412 = vsel %vm1382, %v318, %v673
        %v1413 = vsel %vm1382, %v389, %v675
        %v1414 = vsel %vm1382, %v321, %v677
        %vm1415 = vcmask 64512
        %v1416 = vsel %vm1415, %v1383, %v711
        %v1417 = vsel %vm1415, %v1384, %v713
        %v1418 = vsel %vm1415, %v1385, %v715
        %v1419 = vsel %vm1415, %v1386, %v717
        %v1420 = vsel %vm1415, %v1387, %v719
        %v1421 = vsel %vm1415, %v1388, %v721
        %v1422 = vsel %vm1415, %v1389, %v723
        %v1423 = vsel %vm1415, %v1390, %v725
        %v1424 = vsel %vm1415, %v1391, %v727
        %v1425 = vsel %vm1415, %v1392, %v729
        %v1426 = vsel %vm1415, %v1393, %v731
        %v1427 = vsel %vm1415, %v1394, %v733
        %v1428 = vsel %vm1415, %v1395, %v735
        %v1429 = vsel %vm1415, %v1396, %v737
        %v1430 = vsel %vm1415, %v1397, %v739
        %v1431 = vsel %vm1415, %v1398, %v741
        %v1432 = vsel %vm1415, %v1399, %v743
        %v1433 = vsel %vm1415, %v1400, %v745
        %v1434 = vsel %vm1415, %v1401, %v747
        %v1435 = vsel %vm1415, %v1402, %v749
        %v1436 = vsel %vm1415, %v1403, %v751
        %v1437 = vsel %vm1415, %v1404, %v753
        %v1438 = vsel %vm1415, %v1405, %v755
        %v1439 = vsel %vm1415, %v1406, %v757
        %v1440 = vsel %vm1415, %v1407, %v759
        %v1441 = vsel %vm1415, %v1408, %v761
        %v1442 = vsel %vm1415, %v1409, %v763
        %v1443 = vsel %vm1415, %v1410, %v765
        %v1444 = vsel %vm1415, %v1411, %v767
        %v1445 = vsel %vm1415, %v1412, %v769
        %v1446 = vsel %vm1415, %v1413, %v771
        %v1447 = vsel %vm1415, %v1414, %v773
        %vm1448 = vcmask 97280
        %v1449 = vsel %vm1448, %v1416, %v807
        %v1450 = vsel %vm1448, %v1417, %v809
        %v1451 = vsel %vm1448, %v1418, %v811
        %v1452 = vsel %vm1448, %v1419, %v813
        %v1453 = vsel %vm1448, %v1420, %v815
        %v1454 = vsel %vm1448, %v1421, %v817
        %v1455 = vsel %vm1448, %v1422, %v819
        %v1456 = vsel %vm1448, %v1423, %v821
        %v1457 = vsel %vm1448, %v1424, %v823
        %v1458 = vsel %vm1448, %v1425, %v825
        %v1459 = vsel %vm1448, %v1426, %v827
        %v1460 = vsel %vm1448, %v1427, %v829
        %v1461 = vsel %vm1448, %v1428, %v831
        %v1462 = vsel %vm1448, %v1429, %v833
        %v1463 = vsel %vm1448, %v1430, %v835
        %v1464 = vsel %vm1448, %v1431, %v837
        %v1465 = vsel %vm1448, %v1432, %v839
        %v1466 = vsel %vm1448, %v1433, %v841
        %v1467 = vsel %vm1448, %v1434, %v843
        %v1468 = vsel %vm1448, %v1435, %v845
        %v1469 = vsel %vm1448, %v1436, %v847
        %v1470 = vsel %vm1448, %v1437, %v849
        %v1471 = vsel %vm1448, %v1438, %v851
        %v1472 = vsel %vm1448, %v1439, %v853
        %v1473 = vsel %vm1448, %v1440, %v855
        %v1474 = vsel %vm1448, %v1441, %v857
        %v1475 = vsel %vm1448, %v1442, %v859
        %v1476 = vsel %vm1448, %v1443, %v861
        %v1477 = vsel %vm1448, %v1444, %v863
        %v1478 = vsel %vm1448, %v1445, %v865
        %v1479 = vsel %vm1448, %v1446, %v867
        %v1480 = vsel %vm1448, %v1447, %v869
        %vm1481 = vcmask 130048
        %v1482 = vsel %vm1481, %v1449, %v903
        %v1483 = vsel %vm1481, %v1450, %v905
        %v1484 = vsel %vm1481, %v1451, %v907
        %v1485 = vsel %vm1481, %v1452, %v909
        %v1486 = vsel %vm1481, %v1453, %v911
        %v1487 = vsel %vm1481, %v1454, %v913
        %v1488 = vsel %vm1481, %v1455, %v915
        %v1489 = vsel %vm1481, %v1456, %v917
        %v1490 = vsel %vm1481, %v1457, %v919
        %v1491 = vsel %vm1481, %v1458, %v921
        %v1492 = vsel %vm1481, %v1459, %v923
        %v1493 = vsel %vm1481, %v1460, %v925
        %v1494 = vsel %vm1481, %v1461, %v927
        %v1495 = vsel %vm1481, %v1462, %v929
        %v1496 = vsel %vm1481, %v1463, %v931
        %v1497 = vsel %vm1481, %v1464, %v933
        %v1498 = vsel %vm1481, %v1465, %v935
        %v1499 = vsel %vm1481, %v1466, %v937
        %v1500 = vsel %vm1481, %v1467, %v939
        %v1501 = vsel %vm1481, %v1468, %v941
        %v1502 = vsel %vm1481, %v1469, %v943
        %v1503 = vsel %vm1481, %v1470, %v945
        %v1504 = vsel %vm1481, %v1471, %v947
        %v1505 = vsel %vm1481, %v1472, %v949
        %v1506 = vsel %vm1481, %v1473, %v951
        %v1507 = vsel %vm1481, %v1474, %v953
        %v1508 = vsel %vm1481, %v1475, %v955
        %v1509 = vsel %vm1481, %v1476, %v957
        %v1510 = vsel %vm1481, %v1477, %v959
        %v1511 = vsel %vm1481, %v1478, %v961
        %v1512 = vsel %vm1481, %v1479, %v963
        %v1513 = vsel %vm1481, %v1480, %v965
        %vm1514 = vcmask 162816
        %v1515 = vsel %vm1514, %v1482, %v999
        %v1516 = vsel %vm1514, %v1483, %v1001
        %v1517 = vsel %vm1514, %v1484, %v1003
        %v1518 = vsel %vm1514, %v1485, %v1005
        %v1519 = vsel %vm1514, %v1486, %v1007
        %v1520 = vsel %vm1514, %v1487, %v1009
        %v1521 = vsel %vm1514, %v1488, %v1011
        %v1522 = vsel %vm1514, %v1489, %v1013
        %v1523 = vsel %vm1514, %v1490, %v1015
        %v1524 = vsel %vm1514, %v1491, %v1017
        %v1525 = vsel %vm1514, %v1492, %v1019
        %v1526 = vsel %vm1514, %v1493, %v1021
        %v1527 = vsel %vm1514, %v1494, %v1023
        %v1528 = vsel %vm1514, %v1495, %v1025
        %v1529 = vsel %vm1514, %v1496, %v1027
        %v1530 = vsel %vm1514, %v1497, %v1029
        %v1531 = vsel %vm1514, %v1498, %v1031
        %v1532 = vsel %vm1514, %v1499, %v1033
        %v1533 = vsel %vm1514, %v1500, %v1035
        %v1534 = vsel %vm1514, %v1501, %v1037
        %v1535 = vsel %vm1514, %v1502, %v1039
        %v1536 = vsel %vm1514, %v1503, %v1041
        %v1537 = vsel %vm1514, %v1504, %v1043
        %v1538 = vsel %vm1514, %v1505, %v1045
        %v1539 = vsel %vm1514, %v1506, %v1047
        %v1540 = vsel %vm1514, %v1507, %v1049
        %v1541 = vsel %vm1514, %v1508, %v1051
        %v1542 = vsel %vm1514, %v1509, %v1053
        %v1543 = vsel %vm1514, %v1510, %v1055
        %v1544 = vsel %vm1514, %v1511, %v1057
        %v1545 = vsel %vm1514, %v1512, %v1059
        %v1546 = vsel %vm1514, %v1513, %v1061
        %vm1547 = vcmask 195584
        %v1548 = vsel %vm1547, %v1515, %v1095
        %v1549 = vsel %vm1547, %v1516, %v1097
        %v1550 = vsel %vm1547, %v1517, %v1099
        %v1551 = vsel %vm1547, %v1518, %v1101
        %v1552 = vsel %vm1547, %v1519, %v1103
        %v1553 = vsel %vm1547, %v1520, %v1105
        %v1554 = vsel %vm1547, %v1521, %v1107
        %v1555 = vsel %vm1547, %v1522, %v1109
        %v1556 = vsel %vm1547, %v1523, %v1111
        %v1557 = vsel %vm1547, %v1524, %v1113
        %v1558 = vsel %vm1547, %v1525, %v1115
        %v1559 = vsel %vm1547, %v1526, %v1117
        %v1560 = vsel %vm1547, %v1527, %v1119
        %v1561 = vsel %vm1547, %v1528, %v1121
        %v1562 = vsel %vm1547, %v1529, %v1123
        %v1563 = vsel %vm1547, %v1530, %v1125
        %v1564 = vsel %vm1547, %v1531, %v1127
        %v1565 = vsel %vm1547, %v1532, %v1129
        %v1566 = vsel %vm1547, %v1533, %v1131
        %v1567 = vsel %vm1547, %v1534, %v1133
        %v1568 = vsel %vm1547, %v1535, %v1135
        %v1569 = vsel %vm1547, %v1536, %v1137
        %v1570 = vsel %vm1547, %v1537, %v1139
        %v1571 = vsel %vm1547, %v1538, %v1141
        %v1572 = vsel %vm1547, %v1539, %v1143
        %v1573 = vsel %vm1547, %v1540, %v1145
        %v1574 = vsel %vm1547, %v1541, %v1147
        %v1575 = vsel %vm1547, %v1542, %v1149
        %v1576 = vsel %vm1547, %v1543, %v1151
        %v1577 = vsel %vm1547, %v1544, %v1153
        %v1578 = vsel %vm1547, %v1545, %v1155
        %v1579 = vsel %vm1547, %v1546, %v1157
        %vm1580 = vcmask 228352
        %v1581 = vsel %vm1580, %v1548, %v1191
        %v1582 = vsel %vm1580, %v1549, %v1193
        %v1583 = vsel %vm1580, %v1550, %v1195
        %v1584 = vsel %vm1580, %v1551, %v1197
        %v1585 = vsel %vm1580, %v1552, %v1199
        %v1586 = vsel %vm1580, %v1553, %v1201
        %v1587 = vsel %vm1580, %v1554, %v1203
        %v1588 = vsel %vm1580, %v1555, %v1205
        %v1589 = vsel %vm1580, %v1556, %v1207
        %v1590 = vsel %vm1580, %v1557, %v1209
        %v1591 = vsel %vm1580, %v1558, %v1211
        %v1592 = vsel %vm1580, %v1559, %v1213
        %v1593 = vsel %vm1580, %v1560, %v1215
        %v1594 = vsel %vm1580, %v1561, %v1217
        %v1595 = vsel %vm1580, %v1562, %v1219
        %v1596 = vsel %vm1580, %v1563, %v1221
        %v1597 = vsel %vm1580, %v1564, %v1223
        %v1598 = vsel %vm1580, %v1565, %v1225
        %v1599 = vsel %vm1580, %v1566, %v1227
        %v1600 = vsel %vm1580, %v1567, %v1229
        %v1601 = vsel %vm1580, %v1568, %v1231
        %v1602 = vsel %vm1580, %v1569, %v1233
        %v1603 = vsel %vm1580, %v1570, %v1235
        %v1604 = vsel %vm1580, %v1571, %v1237
        %v1605 = vsel %vm1580, %v1572, %v1239
        %v1606 = vsel %vm1580, %v1573, %v1241
        %v1607 = vsel %vm1580, %v1574, %v1243
        %v1608 = vsel %vm1580, %v1575, %v1245
        %v1609 = vsel %vm1580, %v1576, %v1247
        %v1610 = vsel %vm1580, %v1577, %v1249
        %v1611 = vsel %vm1580, %v1578, %v1251
        %v1612 = vsel %vm1580, %v1579, %v1253
        %vm1613 = vcmask 261120
        %v1614 = vsel %vm1613, %v1581, %v1287
        %v1615 = vsel %vm1613, %v1582, %v1289
        %v1616 = vsel %vm1613, %v1583, %v1291
        %v1617 = vsel %vm1613, %v1584, %v1293
        %v1618 = vsel %vm1613, %v1585, %v1295
        %v1619 = vsel %vm1613, %v1586, %v1297
        %v1620 = vsel %vm1613, %v1587, %v1299
        %v1621 = vsel %vm1613, %v1588, %v1301
        %v1622 = vsel %vm1613, %v1589, %v1303
        %v1623 = vsel %vm1613, %v1590, %v1305
        %v1624 = vsel %vm1613, %v1591, %v1307
        %v1625 = vsel %vm1613, %v1592, %v1309
        %v1626 = vsel %vm1613, %v1593, %v1311
        %v1627 = vsel %vm1613, %v1594, %v1313
        %v1628 = vsel %vm1613, %v1595, %v1315
        %v1629 = vsel %vm1613, %v1596, %v1317
        %v1630 = vsel %vm1613, %v1597, %v1319
        %v1631 = vsel %vm1613, %v1598, %v1321
        %v1632 = vsel %vm1613, %v1599, %v1323
        %v1633 = vsel %vm1613, %v1600, %v1325
        %v1634 = vsel %vm1613, %v1601, %v1327
        %v1635 = vsel %vm1613, %v1602, %v1329
        %v1636 = vsel %vm1613, %v1603, %v1331
        %v1637 = vsel %vm1613, %v1604, %v1333
        %v1638 = vsel %vm1613, %v1605, %v1335
        %v1639 = vsel %vm1613, %v1606, %v1337
        %v1640 = vsel %vm1613, %v1607, %v1339
        %v1641 = vsel %vm1613, %v1608, %v1341
        %v1642 = vsel %vm1613, %v1609, %v1343
        %v1643 = vsel %vm1613, %v1610, %v1345
        %v1644 = vsel %vm1613, %v1611, %v1347
        %v1645 = vsel %vm1613, %v1612, %v1349
        %v1646 = vld [vmem:[%s1] sm:$0xff]
        %v1647 = vld [vmem:[%s1 + $0x8] sm:$0xff]
        %v1648 = vld [vmem:[%s1 + $0x10] sm:$0xff]
        %v1649 = vld [vmem:[%s1 + $0x18] sm:$0xff]
        %v1650 = vld [vmem:[%s1 + $0x20] sm:$0xf]
        %v1651 = vld [vmem:[%s2] sm:$0x1]
        %v1653 = vlaneseq
        %v1654 = vshrl.u32 %v1653, 7
        %v1655 = vsub.s32 0, %v1654
        %v1656 = vrot.slane %v1651, %v1655
        %vm1658 = vcmask 293888
        %v1660 = vsel %vm1658, %v1614, 0
        %v1663 = vsel %vm1658, %v1615, 0
        %v1666 = vsel %vm1658, %v1616, 0
        %v1669 = vsel %vm1658, %v1617, 0
        %v1672 = vsel %vm1658, %v1618, 0
        %v1675 = vsel %vm1658, %v1619, 0
        %v1678 = vsel %vm1658, %v1620, 0
        %v1681 = vsel %vm1658, %v1621, 0
        %v1684 = vsel %vm1658, %v1622, 0
        %v1687 = vsel %vm1658, %v1623, 0
        %v1690 = vsel %vm1658, %v1624, 0
        %v1693 = vsel %vm1658, %v1625, 0
        %v1696 = vsel %vm1658, %v1626, 0
        %v1699 = vsel %vm1658, %v1627, 0
        %v1702 = vsel %vm1658, %v1628, 0
        %v1705 = vsel %vm1658, %v1629, 0
        %v1708 = vsel %vm1658, %v1630, 0
        %v1711 = vsel %vm1658, %v1631, 0
        %v1714 = vsel %vm1658, %v1632, 0
        %v1717 = vsel %vm1658, %v1633, 0
        %v1720 = vsel %vm1658, %v1634, 0
        %v1723 = vsel %vm1658, %v1635, 0
        %v1726 = vsel %vm1658, %v1636, 0
        %v1729 = vsel %vm1658, %v1637, 0
        %v1732 = vsel %vm1658, %v1638, 0
        %v1735 = vsel %vm1658, %v1639, 0
        %v1738 = vsel %vm1658, %v1640, 0
        %v1741 = vsel %vm1658, %v1641, 0
        %v1744 = vsel %vm1658, %v1642, 0
        %v1747 = vsel %vm1658, %v1643, 0
        %v1750 = vsel %vm1658, %v1644, 0
        %v1753 = vsel %vm1658, %v1645, 0
        %vm1755 = vcmask 1043456
        %v1757 = vsel %vm1755, %v1650, 0
        %1759 = vmatprep.subr.mxu0 0.0
        %1760 = vmatpush1.msra.mxu0 %v1646
        %1761 = vmatprep.subr.mxu0 0.0
        %1762 = vmatpush1.msra.mxu0 %v1647
        %1763 = vmatprep.subr.mxu0 0.0
        %1764 = vmatpush1.msra.mxu0 %v1648
        %1765 = vmatprep.subr.mxu0 0.0
        %1766 = vmatpush1.msra.mxu0 %v1649
        %1767 = vmatprep.subr.mxu0 0.0
        %1768 = vmatpush1.msra.mxu0 %v1757
        %1769 = vmatprep.subr.mxu0 0.0
        %1770 = vmatpush1.msra.mxu0 0.0
        %1771 = vmatprep.subr.mxu0 0.0
        %1772 = vmatpush1.msra.mxu0 0.0
        %1773 = vmatprep.subr.mxu0 0.0
        %1774 = vmatpush1.msra.mxu0 0.0
        %1775 = vmatprep.subr.mxu0 0.0
        %1776 = vmatpush1.msra.mxu0 0.0
        %1777 = vmatprep.subr.mxu0 0.0
        %1778 = vmatpush1.msra.mxu0 0.0
        %1779 = vmatprep.subr.mxu0 0.0
        %1780 = vmatpush1.msra.mxu0 0.0
        %1781 = vmatprep.subr.mxu0 0.0
        %1782 = vmatpush1.msra.mxu0 0.0
        %1783 = vmatprep.subr.mxu0 0.0
        %1784 = vmatpush1.msra.mxu0 0.0
        %1785 = vmatprep.subr.mxu0 0.0
        %1786 = vmatpush1.msra.mxu0 0.0
        %1787 = vmatprep.subr.mxu0 0.0
        %1788 = vmatpush1.msra.mxu0 0.0
        %1789 = vmatprep.subr.mxu0 0.0
        %1790 = vmatpush1.msra.mxu0 0.0
        %1791 = vmatprep.subr.mxu0 0.0
        %1792 = vmatpush1.msra.mxu0 0.0
        %1793 = vmatprep.subr.mxu0 0.0
        %1794 = vmatpush1.msra.mxu0 0.0
        %1795 = vmatprep.subr.mxu0 0.0
        %1796 = vmatpush1.msra.mxu0 0.0
        %1797 = vmatprep.subr.mxu0 0.0
        %1798 = vmatpush1.msra.mxu0 0.0
        %1799 = vmatprep.subr.mxu0 0.0
        %1800 = vmatpush1.msra.mxu0 0.0
        %1801 = vmatprep.subr.mxu0 0.0
        %1802 = vmatpush1.msra.mxu0 0.0
        %1803 = vmatprep.subr.mxu0 0.0
        %1804 = vmatpush1.msra.mxu0 0.0
        %1805 = vmatprep.subr.mxu0 0.0
        %1806 = vmatpush1.msra.mxu0 0.0
        %1807 = vmatprep.subr.mxu0 0.0
        %1808 = vmatpush1.msra.mxu0 0.0
        %1809 = vmatprep.subr.mxu0 0.0
        %1810 = vmatpush1.msra.mxu0 0.0
        %1811 = vmatprep.subr.mxu0 0.0
        %1812 = vmatpush1.msra.mxu0 0.0
        %1813 = vmatprep.subr.mxu0 0.0
        %1814 = vmatpush1.msra.mxu0 0.0
        %1815 = vmatprep.subr.mxu0 0.0
        %1816 = vmatpush1.msra.mxu0 0.0
        %1817 = vmatprep.subr.mxu0 0.0
        %1818 = vmatpush1.msra.mxu0 0.0
        %1819 = vmatprep.subr.mxu0 0.0
        %1820 = vmatpush1.msra.mxu0 0.0
        %1821 = vmatprep.subr.mxu0 0.0
        %1822 = vmatpush1.msra.mxu0 0.0
        %1823 = vmatprep.mubr.f32.mxu0 0.0
        %1824 = vmatmul.mubr.f32.gmra.mrb[0].mxu0 %v1660
        %v1825 = vpop.f32.mrb[0].mxu0
        %v1826 = vadd.f32 %v1656, %v1825
        %v1827 = vpop.f32.mrb[0].mxu0
        %1828 = vmatprep.mubr.f32.mxu0 0.0
        %1829 = vmatmul.mubr.f32.gmra.mrb[0].mxu0 %v1663
        %v1830 = vpop.f32.mrb[0].mxu0
        %v1831 = vadd.f32 %v1656, %v1830
        %v1832 = vpop.f32.mrb[0].mxu0
        %1833 = vmatprep.mubr.f32.mxu0 0.0
        %1834 = vmatmul.mubr.f32.gmra.mrb[0].mxu0 %v1666
        %v1835 = vpop.f32.mrb[0].mxu0
        %v1836 = vadd.f32 %v1656, %v1835
        %v1837 = vpop.f32.mrb[0].mxu0
        %1838 = vmatprep.mubr.f32.mxu0 0.0
        %1839 = vmatmul.mubr.f32.gmra.mrb[0].mxu0 %v1669
        %v1840 = vpop.f32.mrb[0].mxu0
        %v1841 = vadd.f32 %v1656, %v1840
        %v1842 = vpop.f32.mrb[0].mxu0
        %1843 = vmatprep.mubr.f32.mxu0 0.0
        %1844 = vmatmul.mubr.f32.gmra.mrb[0].mxu0 %v1672
        %v1845 = vpop.f32.mrb[0].mxu0
        %v1846 = vadd.f32 %v1656, %v1845
        %v1847 = vpop.f32.mrb[0].mxu0
        %1848 = vmatprep.mubr.f32.mxu0 0.0
        %1849 = vmatmul.mubr.f32.gmra.mrb[0].mxu0 %v1675
        %v1850 = vpop.f32.mrb[0].mxu0
        %v1851 = vadd.f32 %v1656, %v1850
        %v1852 = vpop.f32.mrb[0].mxu0
        %1853 = vmatprep.mubr.f32.mxu0 0.0
        %1854 = vmatmul.mubr.f32.gmra.mrb[0].mxu0 %v1678
        %v1855 = vpop.f32.mrb[0].mxu0
        %v1856 = vadd.f32 %v1656, %v1855
        %v1857 = vpop.f32.mrb[0].mxu0
        %1858 = vmatprep.mubr.f32.mxu0 0.0
        %1859 = vmatmul.mubr.f32.gmra.mrb[0].mxu0 %v1681
        %v1860 = vpop.f32.mrb[0].mxu0
        %v1861 = vadd.f32 %v1656, %v1860
        %v1862 = vpop.f32.mrb[0].mxu0
        %1863 = vmatprep.mubr.f32.mxu0 0.0
        %1864 = vmatmul.mubr.f32.gmra.mrb[0].mxu0 %v1684
        %v1865 = vpop.f32.mrb[0].mxu0
        %v1866 = vadd.f32 %v1656, %v1865
        %v1867 = vpop.f32.mrb[0].mxu0
        %1868 = vmatprep.mubr.f32.mxu0 0.0
        %1869 = vmatmul.mubr.f32.gmra.mrb[0].mxu0 %v1687
        %v1870 = vpop.f32.mrb[0].mxu0
        %v1871 = vadd.f32 %v1656, %v1870
        %v1872 = vpop.f32.mrb[0].mxu0
        %1873 = vmatprep.mubr.f32.mxu0 0.0
        %1874 = vmatmul.mubr.f32.gmra.mrb[0].mxu0 %v1690
        %v1875 = vpop.f32.mrb[0].mxu0
        %v1876 = vadd.f32 %v1656, %v1875
        %v1877 = vpop.f32.mrb[0].mxu0
        %1878 = vmatprep.mubr.f32.mxu0 0.0
        %1879 = vmatmul.mubr.f32.gmra.mrb[0].mxu0 %v1693
        %v1880 = vpop.f32.mrb[0].mxu0
        %v1881 = vadd.f32 %v1656, %v1880
        %v1882 = vpop.f32.mrb[0].mxu0
        %1883 = vmatprep.mubr.f32.mxu0 0.0
        %1884 = vmatmul.mubr.f32.gmra.mrb[0].mxu0 %v1696
        %v1885 = vpop.f32.mrb[0].mxu0
        %v1886 = vadd.f32 %v1656, %v1885
        %v1887 = vpop.f32.mrb[0].mxu0
        %1888 = vmatprep.mubr.f32.mxu0 0.0
        %1889 = vmatmul.mubr.f32.gmra.mrb[0].mxu0 %v1699
        %v1890 = vpop.f32.mrb[0].mxu0
        %v1891 = vadd.f32 %v1656, %v1890
        %v1892 = vpop.f32.mrb[0].mxu0
        %1893 = vmatprep.mubr.f32.mxu0 0.0
        %1894 = vmatmul.mubr.f32.gmra.mrb[0].mxu0 %v1702
        %v1895 = vpop.f32.mrb[0].mxu0
        %v1896 = vadd.f32 %v1656, %v1895
        %v1897 = vpop.f32.mrb[0].mxu0
        %1898 = vmatprep.mubr.f32.mxu0 0.0
        %1899 = vmatmul.mubr.f32.gmra.mrb[0].mxu0 %v1705
        %v1900 = vpop.f32.mrb[0].mxu0
        %v1901 = vadd.f32 %v1656, %v1900
        %v1902 = vpop.f32.mrb[0].mxu0
        %1903 = vmatprep.mubr.f32.mxu0 0.0
        %1904 = vmatmul.mubr.f32.gmra.mrb[0].mxu0 %v1708
        %v1905 = vpop.f32.mrb[0].mxu0
        %v1906 = vadd.f32 %v1656, %v1905
        %v1907 = vpop.f32.mrb[0].mxu0
        %1908 = vmatprep.mubr.f32.mxu0 0.0
        %1909 = vmatmul.mubr.f32.gmra.mrb[0].mxu0 %v1711
        %v1910 = vpop.f32.mrb[0].mxu0
        %v1911 = vadd.f32 %v1656, %v1910
        %v1912 = vpop.f32.mrb[0].mxu0
        %1913 = vmatprep.mubr.f32.mxu0 0.0
        %1914 = vmatmul.mubr.f32.gmra.mrb[0].mxu0 %v1714
        %v1915 = vpop.f32.mrb[0].mxu0
        %v1916 = vadd.f32 %v1656, %v1915
        %v1917 = vpop.f32.mrb[0].mxu0
        %1918 = vmatprep.mubr.f32.mxu0 0.0
        %1919 = vmatmul.mubr.f32.gmra.mrb[0].mxu0 %v1717
        %v1920 = vpop.f32.mrb[0].mxu0
        %v1921 = vadd.f32 %v1656, %v1920
        %v1922 = vpop.f32.mrb[0].mxu0
        %1923 = vmatprep.mubr.f32.mxu0 0.0
        %1924 = vmatmul.mubr.f32.gmra.mrb[0].mxu0 %v1720
        %v1925 = vpop.f32.mrb[0].mxu0
        %v1926 = vadd.f32 %v1656, %v1925
        %v1927 = vpop.f32.mrb[0].mxu0
        %1928 = vmatprep.mubr.f32.mxu0 0.0
        %1929 = vmatmul.mubr.f32.gmra.mrb[0].mxu0 %v1723
        %v1930 = vpop.f32.mrb[0].mxu0
        %v1931 = vadd.f32 %v1656, %v1930
        %v1932 = vpop.f32.mrb[0].mxu0
        %1933 = vmatprep.mubr.f32.mxu0 0.0
        %1934 = vmatmul.mubr.f32.gmra.mrb[0].mxu0 %v1726
        %v1935 = vpop.f32.mrb[0].mxu0
        %v1936 = vadd.f32 %v1656, %v1935
        %v1937 = vpop.f32.mrb[0].mxu0
        %1938 = vmatprep.mubr.f32.mxu0 0.0
        %1939 = vmatmul.mubr.f32.gmra.mrb[0].mxu0 %v1729
        %v1940 = vpop.f32.mrb[0].mxu0
        %v1941 = vadd.f32 %v1656, %v1940
        %v1942 = vpop.f32.mrb[0].mxu0
        %1943 = vmatprep.mubr.f32.mxu0 0.0
        %1944 = vmatmul.mubr.f32.gmra.mrb[0].mxu0 %v1732
        %v1945 = vpop.f32.mrb[0].mxu0
        %v1946 = vadd.f32 %v1656, %v1945
        %v1947 = vpop.f32.mrb[0].mxu0
        %1948 = vmatprep.mubr.f32.mxu0 0.0
        %1949 = vmatmul.mubr.f32.gmra.mrb[0].mxu0 %v1735
        %v1950 = vpop.f32.mrb[0].mxu0
        %v1951 = vadd.f32 %v1656, %v1950
        %v1952 = vpop.f32.mrb[0].mxu0
        %1953 = vmatprep.mubr.f32.mxu0 0.0
        %1954 = vmatmul.mubr.f32.gmra.mrb[0].mxu0 %v1738
        %v1955 = vpop.f32.mrb[0].mxu0
        %v1956 = vadd.f32 %v1656, %v1955
        %v1957 = vpop.f32.mrb[0].mxu0
        %1958 = vmatprep.mubr.f32.mxu0 0.0
        %1959 = vmatmul.mubr.f32.gmra.mrb[0].mxu0 %v1741
        %v1960 = vpop.f32.mrb[0].mxu0
        %v1961 = vadd.f32 %v1656, %v1960
        %v1962 = vpop.f32.mrb[0].mxu0
        %1963 = vmatprep.mubr.f32.mxu0 0.0
        %1964 = vmatmul.mubr.f32.gmra.mrb[0].mxu0 %v1744
        %v1965 = vpop.f32.mrb[0].mxu0
        %v1966 = vadd.f32 %v1656, %v1965
        %v1967 = vpop.f32.mrb[0].mxu0
        %1968 = vmatprep.mubr.f32.mxu0 0.0
        %1969 = vmatmul.mubr.f32.gmra.mrb[0].mxu0 %v1747
        %v1970 = vpop.f32.mrb[0].mxu0
        %v1971 = vadd.f32 %v1656, %v1970
        %v1972 = vpop.f32.mrb[0].mxu0
        %1973 = vmatprep.mubr.f32.mxu0 0.0
        %1974 = vmatmul.mubr.f32.gmra.mrb[0].mxu0 %v1750
        %v1975 = vpop.f32.mrb[0].mxu0
        %v1976 = vadd.f32 %v1656, %v1975
        %v1977 = vpop.f32.mrb[0].mxu0
        %1978 = vmatprep.mubr.f32.mxu0 0.0
        %1979 = vmatmul.mubr.f32.gmra.mrb[0].mxu0 %v1753
        %v1980 = vpop.f32.mrb[0].mxu0
        %v1981 = vadd.f32 %v1656, %v1980
        %v1982 = vpop.f32.mrb[0].mxu0
        %1983 = vdwg.mxu0
        %1984 = vst.msk [vmem:[%s208] sm:$0xff] %vm1382, %v1826
        %1985 = vst.msk [vmem:[%s208 + $0x8] sm:$0xff] %vm1382, %v1831
        %1986 = vst.msk [vmem:[%s208 + $0x10] sm:$0xff] %vm1382, %v1836
        %1987 = vst.msk [vmem:[%s208 + $0x18] sm:$0xff] %vm1382, %v1841
        %1988 = vst.msk [vmem:[%s208 + $0x20] sm:$0xff] %vm1382, %v1846
        %1989 = vst.msk [vmem:[%s208 + $0x28] sm:$0xff] %vm1382, %v1851
        %1990 = vst.msk [vmem:[%s208 + $0x30] sm:$0xff] %vm1382, %v1856
        %1991 = vst.msk [vmem:[%s208 + $0x38] sm:$0xff] %vm1382, %v1861
        %1992 = vst.msk [vmem:[%s208 + $0x40] sm:$0xff] %vm1382, %v1866
        %1993 = vst.msk [vmem:[%s208 + $0x48] sm:$0xff] %vm1382, %v1871
        %1994 = vst.msk [vmem:[%s208 + $0x50] sm:$0xff] %vm1382, %v1876
        %1995 = vst.msk [vmem:[%s208 + $0x58] sm:$0xff] %vm1382, %v1881
        %1996 = vst.msk [vmem:[%s208 + $0x60] sm:$0xff] %vm1382, %v1886
        %1997 = vst.msk [vmem:[%s208 + $0x68] sm:$0xff] %vm1382, %v1891
        %1998 = vst.msk [vmem:[%s208 + $0x70] sm:$0xff] %vm1382, %v1896
        %1999 = vst.msk [vmem:[%s208 + $0x78] sm:$0xff] %vm1382, %v1901
        %2000 = vst.msk [vmem:[%s208 + $0x80] sm:$0xff] %vm1382, %v1906
        %2001 = vst.msk [vmem:[%s208 + $0x88] sm:$0xff] %vm1382, %v1911
        %2002 = vst.msk [vmem:[%s208 + $0x90] sm:$0xff] %vm1382, %v1916
        %2003 = vst.msk [vmem:[%s208 + $0x98] sm:$0xff] %vm1382, %v1921
        %2004 = vst.msk [vmem:[%s208 + $0xa0] sm:$0xff] %vm1382, %v1926
        %2005 = vst.msk [vmem:[%s208 + $0xa8] sm:$0xff] %vm1382, %v1931
        %2006 = vst.msk [vmem:[%s208 + $0xb0] sm:$0xff] %vm1382, %v1936
        %2007 = vst.msk [vmem:[%s208 + $0xb8] sm:$0xff] %vm1382, %v1941
        %2008 = vst.msk [vmem:[%s208 + $0xc0] sm:$0xff] %vm1382, %v1946
        %2009 = vst.msk [vmem:[%s208 + $0xc8] sm:$0xff] %vm1382, %v1951
        %2010 = vst.msk [vmem:[%s208 + $0xd0] sm:$0xff] %vm1382, %v1956
        %2011 = vst.msk [vmem:[%s208 + $0xd8] sm:$0xff] %vm1382, %v1961
        %2012 = vst.msk [vmem:[%s208 + $0xe0] sm:$0xff] %vm1382, %v1966
        %2013 = vst.msk [vmem:[%s208 + $0xe8] sm:$0xff] %vm1382, %v1971
        %2014 = vst.msk [vmem:[%s208 + $0xf0] sm:$0xff] %vm1382, %v1976
        %2015 = vst.msk [vmem:[%s208 + $0xf8] sm:$0xff] %vm1382, %v1981
        %v2016 = vsel %vm1382, %v1826, 0.0
        %v2017 = vsel %vm1382, %v1831, 0.0
        %v2018 = vadd.f32 %v2016, %v2017
        %v2019 = vsel %vm1382, %v1836, 0.0
        %v2020 = vadd.f32 %v2018, %v2019
        %v2021 = vsel %vm1382, %v1841, 0.0
        %v2022 = vadd.f32 %v2020, %v2021
        %v2023 = vsel %vm1382, %v1846, 0.0
        %v2024 = vadd.f32 %v2022, %v2023
        %v2025 = vsel %vm1382, %v1851, 0.0
        %v2026 = vadd.f32 %v2024, %v2025
        %v2027 = vsel %vm1382, %v1856, 0.0
        %v2028 = vadd.f32 %v2026, %v2027
        %v2029 = vsel %vm1382, %v1861, 0.0
        %v2030 = vadd.f32 %v2028, %v2029
        %v2031 = vsel %vm1382, %v1866, 0.0
        %v2032 = vadd.f32 %v2030, %v2031
        %v2033 = vsel %vm1382, %v1871, 0.0
        %v2034 = vadd.f32 %v2032, %v2033
        %v2035 = vsel %vm1382, %v1876, 0.0
        %v2036 = vadd.f32 %v2034, %v2035
        %v2037 = vsel %vm1382, %v1881, 0.0
        %v2038 = vadd.f32 %v2036, %v2037
        %v2039 = vsel %vm1382, %v1886, 0.0
        %v2040 = vadd.f32 %v2038, %v2039
        %v2041 = vsel %vm1382, %v1891, 0.0
        %v2042 = vadd.f32 %v2040, %v2041
        %v2043 = vsel %vm1382, %v1896, 0.0
        %v2044 = vadd.f32 %v2042, %v2043
        %v2045 = vsel %vm1382, %v1901, 0.0
        %v2046 = vadd.f32 %v2044, %v2045
        %v2047 = vsel %vm1382, %v1906, 0.0
        %v2048 = vadd.f32 %v2046, %v2047
        %v2049 = vsel %vm1382, %v1911, 0.0
        %v2050 = vadd.f32 %v2048, %v2049
        %v2051 = vsel %vm1382, %v1916, 0.0
        %v2052 = vadd.f32 %v2050, %v2051
        %v2053 = vsel %vm1382, %v1921, 0.0
        %v2054 = vadd.f32 %v2052, %v2053
        %v2055 = vsel %vm1382, %v1926, 0.0
        %v2056 = vadd.f32 %v2054, %v2055
        %v2057 = vsel %vm1382, %v1931, 0.0
        %v2058 = vadd.f32 %v2056, %v2057
        %v2059 = vsel %vm1382, %v1936, 0.0
        %v2060 = vadd.f32 %v2058, %v2059
        %v2061 = vsel %vm1382, %v1941, 0.0
        %v2062 = vadd.f32 %v2060, %v2061
        %v2063 = vsel %vm1382, %v1946, 0.0
        %v2064 = vadd.f32 %v2062, %v2063
        %v2065 = vsel %vm1382, %v1951, 0.0
        %v2066 = vadd.f32 %v2064, %v2065
        %v2067 = vsel %vm1382, %v1956, 0.0
        %v2068 = vadd.f32 %v2066, %v2067
        %v2069 = vsel %vm1382, %v1961, 0.0
        %v2070 = vadd.f32 %v2068, %v2069
        %v2071 = vsel %vm1382, %v1966, 0.0
        %v2072 = vadd.f32 %v2070, %v2071
        %v2073 = vsel %vm1382, %v1971, 0.0
        %v2074 = vadd.f32 %v2072, %v2073
        %v2075 = vsel %vm1382, %v1976, 0.0
        %v2076 = vadd.f32 %v2074, %v2075
        %v2077 = vsel %vm1382, %v1981, 0.0
        %v2078 = vadd.f32 %v2076, %v2077
        %v2079 = vrot.slane %v2078, 4
        %v2080 = vadd.f32 %v2078, %v2079
        %v2081 = vrot.slane %v2080, 2
        %v2082 = vadd.f32 %v2080, %v2081
        %v2083 = vrot.slane %v2082, 1
        %v2084 = vadd.f32 %v2082, %v2083
        %v2085 = vmul.f32 %v1826, %v1826
        %v2086 = vmul.f32 %v1831, %v1831
        %v2087 = vmul.f32 %v1836, %v1836
        %v2088 = vmul.f32 %v1841, %v1841
        %v2089 = vmul.f32 %v1846, %v1846
        %v2090 = vmul.f32 %v1851, %v1851
        %v2091 = vmul.f32 %v1856, %v1856
        %v2092 = vmul.f32 %v1861, %v1861
        %v2093 = vmul.f32 %v1866, %v1866
        %v2094 = vmul.f32 %v1871, %v1871
        %v2095 = vmul.f32 %v1876, %v1876
        %v2096 = vmul.f32 %v1881, %v1881
        %v2097 = vmul.f32 %v1886, %v1886
        %v2098 = vmul.f32 %v1891, %v1891
        %v2099 = vmul.f32 %v1896, %v1896
        %v2100 = vmul.f32 %v1901, %v1901
        %v2101 = vmul.f32 %v1906, %v1906
        %v2102 = vmul.f32 %v1911, %v1911
        %v2103 = vmul.f32 %v1916, %v1916
        %v2104 = vmul.f32 %v1921, %v1921
        %v2105 = vmul.f32 %v1926, %v1926
        %v2106 = vmul.f32 %v1931, %v1931
        %v2107 = vmul.f32 %v1936, %v1936
        %v2108 = vmul.f32 %v1941, %v1941
        %v2109 = vmul.f32 %v1946, %v1946
        %v2110 = vmul.f32 %v1951, %v1951
        %v2111 = vmul.f32 %v1956, %v1956
        %v2112 = vmul.f32 %v1961, %v1961
        %v2113 = vmul.f32 %v1966, %v1966
        %v2114 = vmul.f32 %v1971, %v1971
        %v2115 = vmul.f32 %v1976, %v1976
        %v2116 = vmul.f32 %v1981, %v1981
        %v2117 = vsel %vm1382, %v2085, 0.0
        %v2118 = vsel %vm1382, %v2086, 0.0
        %v2119 = vadd.f32 %v2117, %v2118
        %v2120 = vsel %vm1382, %v2087, 0.0
        %v2121 = vadd.f32 %v2119, %v2120
        %v2122 = vsel %vm1382, %v2088, 0.0
        %v2123 = vadd.f32 %v2121, %v2122
        %v2124 = vsel %vm1382, %v2089, 0.0
        %v2125 = vadd.f32 %v2123, %v2124
        %v2126 = vsel %vm1382, %v2090, 0.0
        %v2127 = vadd.f32 %v2125, %v2126
        %v2128 = vsel %vm1382, %v2091, 0.0
        %v2129 = vadd.f32 %v2127, %v2128
        %v2130 = vsel %vm1382, %v2092, 0.0
        %v2131 = vadd.f32 %v2129, %v2130
        %v2132 = vsel %vm1382, %v2093, 0.0
        %v2133 = vadd.f32 %v2131, %v2132
        %v2134 = vsel %vm1382, %v2094, 0.0
        %v2135 = vadd.f32 %v2133, %v2134
        %v2136 = vsel %vm1382, %v2095, 0.0
        %v2137 = vadd.f32 %v2135, %v2136
        %v2138 = vsel %vm1382, %v2096, 0.0
        %v2139 = vadd.f32 %v2137, %v2138
        %v2140 = vsel %vm1382, %v2097, 0.0
        %v2141 = vadd.f32 %v2139, %v2140
        %v2142 = vsel %vm1382, %v2098, 0.0
        %v2143 = vadd.f32 %v2141, %v2142
        %v2144 = vsel %vm1382, %v2099, 0.0
        %v2145 = vadd.f32 %v2143, %v2144
        %v2146 = vsel %vm1382, %v2100, 0.0
        %v2147 = vadd.f32 %v2145, %v2146
        %v2148 = vsel %vm1382, %v2101, 0.0
        %v2149 = vadd.f32 %v2147, %v2148
        %v2150 = vsel %vm1382, %v2102, 0.0
        %v2151 = vadd.f32 %v2149, %v2150
        %v2152 = vsel %vm1382, %v2103, 0.0
        %v2153 = vadd.f32 %v2151, %v2152
        %v2154 = vsel %vm1382, %v2104, 0.0
        %v2155 = vadd.f32 %v2153, %v2154
        %v2156 = vsel %vm1382, %v2105, 0.0
        %v2157 = vadd.f32 %v2155, %v2156
        %v2158 = vsel %vm1382, %v2106, 0.0
        %v2159 = vadd.f32 %v2157, %v2158
        %v2160 = vsel %vm1382, %v2107, 0.0
        %v2161 = vadd.f32 %v2159, %v2160
        %v2162 = vsel %vm1382, %v2108, 0.0
        %v2163 = vadd.f32 %v2161, %v2162
        %v2164 = vsel %vm1382, %v2109, 0.0
        %v2165 = vadd.f32 %v2163, %v2164
        %v2166 = vsel %vm1382, %v2110, 0.0
        %v2167 = vadd.f32 %v2165, %v2166
        %v2168 = vsel %vm1382, %v2111, 0.0
        %v2169 = vadd.f32 %v2167, %v2168
        %v2170 = vsel %vm1382, %v2112, 0.0
        %v2171 = vadd.f32 %v2169, %v2170
        %v2172 = vsel %vm1382, %v2113, 0.0
        %v2173 = vadd.f32 %v2171, %v2172
        %v2174 = vsel %vm1382, %v2114, 0.0
        %v2175 = vadd.f32 %v2173, %v2174
        %v2176 = vsel %vm1382, %v2115, 0.0
        %v2177 = vadd.f32 %v2175, %v2176
        %v2178 = vsel %vm1382, %v2116, 0.0
        %v2179 = vadd.f32 %v2177, %v2178
        %v2180 = vrot.slane %v2179, 4
        %v2181 = vadd.f32 %v2179, %v2180
        %v2182 = vrot.slane %v2181, 2
        %v2183 = vadd.f32 %v2181, %v2182
        %v2184 = vrot.slane %v2183, 1
        %v2185 = vadd.f32 %v2183, %v2184
        %v2186 = vsel %vm274, %v2084, %v2185
        %vm2187 = vcmask 25600
        %2188 = vst.msk [vmem:[%s198] sm:$0x3] %vm2187, %v2186
        %p2189 = scmp.lt.s32.totalorder %s19, 1
        %s2190 = scalar_select %p2189, %s19, 1
        %s2191 = smul.addr %s2190, 32
        %s2192 = smul.addr %s2191, 8
        %s2193 = scalar_lea.vmem %s3, %s2192
        %s2194 = sand.u32 %s121, 1
        %s2195 = scalar_lea.sflag [#allocation3], %s2194
        %s2196 = sand.u32 %s121, 1
        %s2197 = smul.addr %s2196, 2
        %s2198 = scalar_lea.vmem [#allocation2], %s2197
        // Predicated region
        $region33: #{tpu_custom_call.1} parent=31 // pred_check
          %p2199 = pneg %p105
        $region34: #{tpu_custom_call.1} parent=31 // pred_check_branch
          %2201 = sbr.rel (%p2199) target = $region36
        $region35: #{tpu_custom_call.1} parent=31 // pred_region
          _
        $region36: #{tpu_custom_call.1} parent=31 // pred_fallthru
          _
        // Predicated region
        $region37: #{tpu_custom_call.1} parent=31 // pred_check
          %p2202 = pneg %p131
        $region38: #{tpu_custom_call.1} parent=31 // pred_check_branch
          %2204 = sbr.rel (%p2202) target = $region40
        $region39: #{tpu_custom_call.1} parent=31 // pred_region
          %s2206 = ssub.s32 32, 32
          %2207 = vsyncadd %s2195, %s2206
          %s2208 = smul.addr %s19, 32
          %s2209 = scalar_lea.hbm %s4, %s2208
          %s2211 = sshll.u32 %s2198, 4
          %s2212 = int_to_ptr.vmem [resolvable:$true] %s2211
          %2214 = dma.vmem_to_hbm [thread:$0]  %s2212, 32, %s2209, %s2195
        $region40: #{tpu_custom_call.1} parent=31 // pred_fallthru
          _
      $region32: #{tpu_custom_call.1} parent=5 // pred_fallthru
        _
      %p2215 = scmp.le.s32.totalorder 2, %s14
      // Predicated region
      $region41: #{tpu_custom_call.1} parent=5 // pred_check
        %p2216 = pneg %p2215
      $region42: #{tpu_custom_call.1} parent=5 // pred_check_branch
        %2218 = sbr.rel (%p2216) target = $region44
      $region43: #{tpu_custom_call.1} parent=5 // pred_region
        %s2219 = ssub.s32 %s14, 2
        // Predicated region
        $region45: #{tpu_custom_call.1} parent=43 // pred_check
          %p2220 = pneg %p111
        $region46: #{tpu_custom_call.1} parent=43 // pred_check_branch
          %2222 = sbr.rel (%p2220) target = $region48
        $region47: #{tpu_custom_call.1} parent=43 // pred_region
          %p2223 = scmp.lt.s32.totalorder %s20, 1
          %s2224 = scalar_select %p2223, %s20, 1
          %s2225 = smul.addr %s2224, 32
          %s2226 = smul.addr %s2225, 8
          %s2227 = scalar_lea.vmem %s3, %s2226
        $region48: #{tpu_custom_call.1} parent=43 // pred_fallthru
          _
        // Predicated region
        $region49: #{tpu_custom_call.1} parent=43 // pred_check
          %p2228 = pneg %p137
        $region50: #{tpu_custom_call.1} parent=43 // pred_check_branch
          %2230 = sbr.rel (%p2228) target = $region52
        $region51: #{tpu_custom_call.1} parent=43 // pred_region
          %s2231 = sand.u32 %s122, 1
          %s2232 = scalar_lea.sflag [#allocation3], %s2231
          %s2233 = sand.u32 %s122, 1
          %s2234 = smul.addr %s2233, 2
          %s2235 = scalar_lea.vmem [#allocation2], %s2234
          %2236 = dma.done %s2232, 32
        $region52: #{tpu_custom_call.1} parent=43 // pred_fallthru
          _
      $region44: #{tpu_custom_call.1} parent=5 // pred_fallthru
        _
    $region6: #{tpu_custom_call.1} parent=1 // loop_footer
      %s18 = sadd.s32 1, %s14
    $region7: #{tpu_custom_call.1} parent=1 // loop_footer_branch
      %13 = sbr.rel target = $region3
    $region8: #{tpu_custom_call.1} parent=1 // loop_exit
      _
    %2237 = vsyncpa [#allocation3], 1
    %s2238 = scalar_lea.sflag [#allocation3], 1
    %2239 = vsyncpa %s2238, 1

</llo_original>
